<compile_context>
chip_gen: v7x
topology: tpu7x:2x2x1
jax: 0.10.0
libtpu: 0.0.40
codegen_flags: <defaults>
</compile_context>

<pallas_src>
import functools

import jax
import jax.numpy as jnp
from jax.experimental import pallas as pl
from jax.experimental.pallas import tpu as pltpu


# ----------------------------------------------------------------------------
# VMEM budget (generation-aware)
# ----------------------------------------------------------------------------
def _vmem_limit_bytes():
  cap = 64 * 1024 * 1024
  try:
    cap = int(getattr(pltpu.get_tpu_info(), "vmem_capacity_bytes", cap))
  except Exception:  # pragma: no cover - conservative fallback off-TPU
    pass
  # ~3/4 of physical per-core VMEM: v5e/v6e (128 MiB) -> 96 MiB, v7x -> 48 MiB.
  return max(32 * 1024 * 1024, min(cap * 3 // 4, 100 * 1024 * 1024))


# ----------------------------------------------------------------------------
# Host-side constant: block-diagonal per-(shift, head) reduce / broadcast mats
# ----------------------------------------------------------------------------
def make_band_matrices(dim, num_head, band_width, dtype=jnp.bfloat16):
  """msum: (bw*D, bw*H) head-sum matrix with 1/sqrt(head_dim) folded in.
     msel: (bw*H, bw*D) head-broadcast matrix (transpose of unscaled msum)."""
  hd = dim // num_head
  scale = hd ** -0.5
  row = jnp.arange(band_width * dim)
  col = jnp.arange(band_width * num_head)
  same_shift = (row[:, None] // dim) == (col[None, :] // num_head)
  same_head = ((row[:, None] % dim) // hd) == (col[None, :] % num_head)
  onehot = (same_shift & same_head).astype(jnp.float32)      # (bw*D, bw*H)
  msum = (onehot * scale).astype(dtype)
  msel = onehot.T.astype(dtype)                               # (bw*H, bw*D)
  return msum, msel


# ----------------------------------------------------------------------------
# Pallas kernels
# ----------------------------------------------------------------------------
def bt_block_kernel(
    x_ref, wn1_ref, wqkv_ref, wo_ref, lk_ref, lv_ref, wn2_ref,
    wff_ref, bff_ref, wfco_ref, bfco_ref, msum_ref, msel_ref, wnlast_ref,
    o_ref,
    kcarry_ref, vcarry_ref,
    *, num_head, band_width, eps, apply_final_norm,
):
  lt = pl.program_id(1)                          # L-tile index (sequential)
  f32 = jnp.float32
  bf16 = jnp.bfloat16
  x = x_ref[0].astype(f32)                       # (TL, D) residual stream in f32
  TL, D = x.shape
  H = num_head
  bw = band_width

  # ---- RMSNorm (pre-attention), f32 ----
  ms = jnp.mean(x * x, axis=-1, keepdims=True)
  xn = x * jax.lax.rsqrt(ms + eps) * wn1_ref[0]

  # ---- fused Q|K|V projection (bf16 operands, f32 MXU accumulation) ----
  qkv = jnp.dot(xn.astype(bf16), wqkv_ref[...], preferred_element_type=f32)
  q = qkv[:, :D]
  k = qkv[:, D:2 * D]
  v = qkv[:, 2 * D:]

  # ---- band carry: only the trailing (bw-1, D) rows live in scratch; the
  # current tile's k/v stay in registers.  Seed from the learned init on the
  # first L-tile of every batch.  (Correct only because the lt axis is
  # "arbitrary"/sequential and innermost -- do not mark it "parallel".)
  @pl.when(lt == 0)
  def _():
    kcarry_ref[...] = lk_ref[...]
    vcarry_ref[...] = lv_ref[...]
  kcat = jnp.concatenate([kcarry_ref[...], k], axis=0)   # (TL + bw - 1, D)
  vcat = jnp.concatenate([vcarry_ref[...], v], axis=0)
  kcarry_ref[...] = k[TL - (bw - 1):, :]                 # carry to next L-tile
  vcarry_ref[...] = v[TL - (bw - 1):, :]

  # ---- banded attention: ALL shifts x heads in one lane-dense matmul ----
  q_rep = jnp.concatenate([q] * bw, axis=1)                               # (TL, bw*D)
  k_band = jnp.concatenate([kcat[i:i + TL, :] for i in range(bw)], axis=1)
  prod = (q_rep * k_band).astype(bf16)                                    # (TL, bw*D)
  s = jnp.dot(prod, msum_ref[...], preferred_element_type=f32)            # (TL, bw*H)

  # softmax over the shift axis (columns i*H .. i*H+H-1 hold shift i)
  m = s[:, 0:H]
  for i in range(1, bw):
    m = jnp.maximum(m, s[:, i * H:(i + 1) * H])
  e = jnp.exp(s - jnp.concatenate([m] * bw, axis=1))      # single wide EUP pass
  den = e[:, 0:H]
  for i in range(1, bw):
    den = den + e[:, i * H:(i + 1) * H]
  # ~12-bit reciprocal on the EUP slot; swap for exact 1/den if tighter
  # tolerances vs the f32 reference are ever required.
  inv = pl.reciprocal(den, approx=True)
  w = e * jnp.concatenate([inv] * bw, axis=1)                             # (TL, bw*H)

  # broadcast weights back to per-head lanes with ONE matmul, one wide FMA
  wb = jnp.dot(w.astype(bf16), msel_ref[...], preferred_element_type=f32)  # (TL, bw*D)
  v_band = jnp.concatenate([vcat[i:i + TL, :] for i in range(bw)], axis=1)
  weighted = wb * v_band
  attn = weighted[:, 0:D]
  for i in range(1, bw):                                   # 128-aligned lane slices
    attn = attn + weighted[:, i * D:(i + 1) * D]

  # ---- output projection + residual (residual stream math stays f32) ----
  x1 = x + jnp.dot(attn.astype(bf16), wo_ref[...], preferred_element_type=f32)

  # ---- RMSNorm (pre-FFN) + fused SwiGLU FFN ----
  # TODO(synk): for very large Dff on v7x (64 MiB VMEM) the resident wff/wfco no
  # longer fit; add a Dff grid axis / inner pipeline over Dff chunks there.
  ms2 = jnp.mean(x1 * x1, axis=-1, keepdims=True)
  xn2 = x1 * jax.lax.rsqrt(ms2 + eps) * wn2_ref[0]
  hh = jnp.dot(xn2.astype(bf16), wff_ref[...], preferred_element_type=f32) + bff_ref[0]
  Dff = hh.shape[1] // 2
  h1 = hh[:, :Dff]
  h2 = hh[:, Dff:]
  hg = h1 * (h2 * jax.nn.sigmoid(h2))                      # SwiGLU
  y = jnp.dot(hg.astype(bf16), wfco_ref[...], preferred_element_type=f32) + bfco_ref[0]

  out = x1 + y
  if apply_final_norm:                                     # folded norm_last
    ms3 = jnp.mean(out * out, axis=-1, keepdims=True)
    out = out * jax.lax.rsqrt(ms3 + eps) * wnlast_ref[0]
  o_ref[0] = out.astype(o_ref.dtype)


def head_kernel(x_ref, wout_ref, bout_ref, o_ref):
  # x is already RMS-normalized (final norm folded into the last block).
  o_ref[...] = (jnp.dot(x_ref[...].astype(jnp.bfloat16), wout_ref[...],
                        preferred_element_type=jnp.float32)
                + bout_ref[0]).astype(o_ref.dtype)


# ----------------------------------------------------------------------------
# Wrappers
# ----------------------------------------------------------------------------
def run_block(x, p, msum, msel, wn_last, *, num_head, band_width, tile_l=None,
              eps=1e-6, apply_final_norm=False, out_dtype=jnp.bfloat16):
  B, L, D = x.shape
  bw = band_width
  H = num_head
  assert D % num_head == 0, "dim must be a multiple of num_head"
  assert bw >= 2, "band_width == 1 (empty cache) is not supported here"
  if tile_l is None:
    tile_l = L
    for t in (512, 256, 128, 64, 32, 16, 8):   # MXU-friendly M, divides L
      if L % t == 0:
        tile_l = t
        break
  TL = tile_l
  assert L % TL == 0 and TL >= bw - 1, "tile_l must divide L and be >= bw-1"
  if out_dtype == jnp.bfloat16 or x.dtype == jnp.bfloat16:
    assert TL % 16 == 0 or TL == L, "bf16 activation tiles need 16-row alignment"
  NLT = L // TL
  Dff2 = p["wff"].shape[1]
  Dff = p["wfco"].shape[0]

  kernel = functools.partial(bt_block_kernel, num_head=num_head, band_width=bw,
                             eps=eps, apply_final_norm=apply_final_norm)

  def const_spec(shape):
    n = len(shape)
    return pl.BlockSpec(shape, lambda b, lt, n=n: (0,) * n)

  in_specs = [
      pl.BlockSpec((1, TL, D), lambda b, lt: (b, lt, 0)),   # x
      const_spec((1, D)),                                   # norm1 weight
      const_spec((D, 3 * D)),                               # fused wq|wk|wv
      const_spec((D, D)),                                   # wo
      const_spec((bw - 1, D)),                              # last_k_init
      const_spec((bw - 1, D)),                              # last_v_init
      const_spec((1, D)),                                   # norm2 weight
      const_spec((D, Dff2)),                                # fused wfc|wfc_act
      const_spec((1, Dff2)),                                # fused bfc|bfc_act
      const_spec((Dff, D)),                                 # wfc_out
      const_spec((1, D)),                                   # bfc_out
      const_spec((bw * D, bw * H)),                         # msum (scale folded)
      const_spec((bw * H, bw * D)),                         # msel
      const_spec((1, D)),                                   # final norm weight
  ]

  flops = int(2 * B * L * (D * 3 * D + D * D + D * Dff2 + Dff * D
                           + 2 * (bw * D) * (bw * H)))
  transc = int(B * L * (Dff + bw * H + H + 3))
  bytes_acc = int(
      x.size * x.dtype.itemsize + B * L * D * jnp.dtype(out_dtype).itemsize
      + sum(int(v.size) * v.dtype.itemsize for v in p.values())
      + msum.size * msum.dtype.itemsize + msel.size * msel.dtype.itemsize
      + wn_last.size * wn_last.dtype.itemsize)

  return pl.pallas_call(
      kernel,
      out_shape=jax.ShapeDtypeStruct((B, L, D), out_dtype),
      grid_spec=pltpu.PrefetchScalarGridSpec(
          num_scalar_prefetch=0,
          grid=(B, NLT),
          in_specs=in_specs,
          out_specs=pl.BlockSpec((1, TL, D), lambda b, lt: (b, lt, 0)),
          scratch_shapes=[
              pltpu.VMEM((bw - 1, D), jnp.float32),         # k band carry rows
              pltpu.VMEM((bw - 1, D), jnp.float32),         # v band carry rows
          ]),
      compiler_params=pltpu.CompilerParams(
          # L-tile axis MUST remain "arbitrary" (sequential, innermost): the
          # k/v band carry in scratch relies on in-order tiles per batch.
          dimension_semantics=("parallel", "arbitrary"),
          vmem_limit_bytes=_vmem_limit_bytes()),
      cost_estimate=pl.CostEstimate(flops=flops, transcendentals=transc,
                                    bytes_accessed=bytes_acc),
  )(x, p["wn1"], p["wqkv"], p["wo"], p["lk"], p["lv"], p["wn2"],
    p["wff"], p["bff"], p["wfco"], p["bfco"], msum, msel, wn_last)


def run_head(x2d, wout, bout, *, tile_m=None, tile_v=None):
  """x2d: (B*L, D) already-normalized activations -> logits (B*L, V)."""
  M, D = x2d.shape
  V = wout.shape[1]
  TM = M if tile_m is None else tile_m
  TV = min(V, 512) if tile_v is None else tile_v
  assert M % TM == 0 and V % TV == 0
  flops = int(2 * M * D * V)
  bytes_acc = int(M * D * x2d.dtype.itemsize + M * V * 4
                  + D * V * wout.dtype.itemsize + V * 4)
  return pl.pallas_call(
      head_kernel,
      out_shape=jax.ShapeDtypeStruct((M, V), jnp.float32),
      grid_spec=pltpu.PrefetchScalarGridSpec(
          num_scalar_prefetch=0,
          grid=(M // TM, V // TV),
          in_specs=[
              pl.BlockSpec((TM, D), lambda i, j: (i, 0)),
              pl.BlockSpec((D, TV), lambda i, j: (0, j)),
              pl.BlockSpec((1, TV), lambda i, j: (0, j)),
          ],
          out_specs=pl.BlockSpec((TM, TV), lambda i, j: (i, j))),
      compiler_params=pltpu.CompilerParams(
          dimension_semantics=("parallel", "parallel"),
          vmem_limit_bytes=_vmem_limit_bytes()),
      cost_estimate=pl.CostEstimate(flops=flops, transcendentals=0,
                                    bytes_accessed=bytes_acc),
  )(x2d, wout, bout)


# ----------------------------------------------------------------------------
# Deterministic parameter init (synthetic, mirrors module __init__ shapes)
# ----------------------------------------------------------------------------
def init_block_params(key, dim, num_head, dim_ff_hidden, band_width):
  ks = jax.random.split(key, 12)
  lin = lambda k, fi, fo: (jax.random.normal(k, (fi, fo), jnp.float32)
                           / jnp.sqrt(jnp.float32(fi)))
  wq, wk, wv, wo = (lin(ks[i], dim, dim) for i in range(4))
  wfc = lin(ks[6], dim, dim_ff_hidden)
  wfca = lin(ks[8], dim, dim_ff_hidden)
  bfc = 0.02 * jax.random.normal(ks[7], (1, dim_ff_hidden), jnp.float32)
  bfca = 0.02 * jax.random.normal(ks[9], (1, dim_ff_hidden), jnp.float32)
  return dict(
      wn1=jnp.ones((1, dim), jnp.float32),
      # matmul weights stored bf16 (MXU operands); biases/norms stay f32
      wqkv=jnp.concatenate([wq, wk, wv], axis=1).astype(jnp.bfloat16),
      wo=wo.astype(jnp.bfloat16),
      # last_{k,v}_init: (band_width-1, num_head, head_dim) flattened
      lk=jax.random.normal(ks[4], (band_width - 1, dim), jnp.float32),
      lv=jax.random.normal(ks[5], (band_width - 1, dim), jnp.float32),
      wn2=jnp.ones((1, dim), jnp.float32),
      wff=jnp.concatenate([wfc, wfca], axis=1).astype(jnp.bfloat16),
      bff=jnp.concatenate([bfc, bfca], axis=1),
      wfco=lin(ks[10], dim_ff_hidden, dim).astype(jnp.bfloat16),
      bfco=0.02 * jax.random.normal(ks[11], (1, dim), jnp.float32),
  )


# ----------------------------------------------------------------------------
# Pure-JAX references (mirror the PyTorch forward).  `matched=True` also casts
# matmul operands / attention products / layer boundaries to bf16 to match the
# kernel's numerics.
# ----------------------------------------------------------------------------
def _rmsnorm_ref(x, w, eps=1e-6):
  return x * jax.lax.rsqrt(jnp.mean(x * x, axis=-1, keepdims=True) + eps) * w


def _dot_ref(a, b, matched):
  if matched:
    return jnp.dot(a.astype(jnp.bfloat16), b.astype(jnp.bfloat16),
                   preferred_element_type=jnp.float32)
  return jnp.dot(a, b, precision=jax.lax.Precision.HIGHEST)


def _block_ref(x, p, num_head, band_width, matched, eps=1e-6):
  B, L, D = x.shape
  Hd = D // num_head
  bw = band_width
  f32 = jnp.float32
  wqkv = p["wqkv"].astype(f32)
  wq, wk, wv = wqkv[:, :D], wqkv[:, D:2 * D], wqkv[:, 2 * D:]
  wo = p["wo"].astype(f32)
  wff = p["wff"].astype(f32)
  Dff = wff.shape[1] // 2
  wfc, wfca = wff[:, :Dff], wff[:, Dff:]
  bfc, bfca = p["bff"][0, :Dff], p["bff"][0, Dff:]
  wfco = p["wfco"].astype(f32)
  bfco = p["bfco"][0]

  xn = _rmsnorm_ref(x, p["wn1"][0], eps)
  q = _dot_ref(xn, wq, matched).reshape(B, L, num_head, Hd)
  k = _dot_ref(xn, wk, matched).reshape(B, L, num_head, Hd)
  v = _dot_ref(xn, wv, matched).reshape(B, L, num_head, Hd)
  lk = jnp.broadcast_to(p["lk"].reshape(1, bw - 1, num_head, Hd),
                        (B, bw - 1, num_head, Hd))
  lv = jnp.broadcast_to(p["lv"].reshape(1, bw - 1, num_head, Hd),
                        (B, bw - 1, num_head, Hd))
  kc = jnp.concatenate([lk, k], axis=1)
  vc = jnp.concatenate([lv, v], axis=1)

  def band_scores(i):
    prod = q * kc[:, i:i + L]
    if matched:
      prod = prod.astype(jnp.bfloat16).astype(f32)
    return jnp.sum(prod, axis=-1)                           # (B, L, H)

  att = jnp.stack([band_scores(i) for i in range(bw)], axis=2) * (Hd ** -0.5)
  att = jax.nn.softmax(att, axis=2)                         # (B, L, bw, H)
  if matched:
    att = att.astype(jnp.bfloat16).astype(f32)
  out = sum(att[:, :, i, :, None] * vc[:, i:i + L] for i in range(bw))
  x1 = x + _dot_ref(out.reshape(B, L, D), wo, matched)
  xn2 = _rmsnorm_ref(x1, p["wn2"][0], eps)
  h = (_dot_ref(xn2, wfc, matched) + bfc) * jax.nn.silu(
      _dot_ref(xn2, wfca, matched) + bfca)
  return x1 + _dot_ref(h, wfco, matched) + bfco


# ----------------------------------------------------------------------------
# Main
# ----------------------------------------------------------------------------
if __name__ == "__main__":
  depth = 2
  dim = 128            # lane-aligned
  num_head = 8
  dim_ff_hidden = 256
  band_width = 4
  vocab_size = 128
  batch, length = 2, 32
  tile_l = 16          # exercises the cross-tile k/v band carry (16-aligned for bf16 I/O)
  eps = 1e-6

  root = jax.random.PRNGKey(0)
  k_emb, k_tok, k_out, k_bout, *k_blocks = jax.random.split(root, 4 + depth)

  # Embedding (nn.Embedding(vocab_size, dim, max_norm=1)): renormalize rows with
  # L2 norm > 1 to norm 1, gather in plain JAX.
  emb = jax.random.normal(k_emb, (vocab_size, dim), jnp.float32)
  norms = jnp.sqrt(jnp.sum(emb * emb, axis=1, keepdims=True))
  emb = emb * jnp.where(norms > 1.0, 1.0 / (norms + 1e-7), 1.0)

  block_params = [
      init_block_params(k_blocks[i], dim, num_head, dim_ff_hidden, band_width)
      for i in range(depth)
  ]
  wn_last = jnp.ones((1, dim), jnp.float32)
  w_out = (jax.random.normal(k_out, (dim, vocab_size), jnp.float32)
           / jnp.sqrt(jnp.float32(dim))).astype(jnp.bfloat16)
  b_out = 0.02 * jax.random.normal(k_bout, (1, vocab_size), jnp.float32)

  tokens = jax.random.randint(k_tok, (batch, length), 0, vocab_size)
  x = jnp.take(emb, tokens, axis=0)              # (batch, length, dim) f32

  msum, msel = make_band_matrices(dim, num_head, band_width)

  # --- Pallas forward (residual stream stored bf16 between pallas_calls) ---
  h = x.astype(jnp.bfloat16)
  for li, p in enumerate(block_params):
    h = run_block(h, p, msum, msel, wn_last,
                  num_head=num_head, band_width=band_width, tile_l=tile_l,
                  eps=eps, apply_final_norm=(li == depth - 1),
                  out_dtype=jnp.bfloat16)
  logits = run_head(h.reshape(batch * length, dim), w_out, b_out, tile_v=128)
  logits = jax.block_until_ready(logits).reshape(batch, length, vocab_size)
  assert logits.shape == (batch, length, vocab_size)

  # --- references ---
  def forward_ref(matched):
    hr = x.astype(jnp.bfloat16).astype(jnp.float32) if matched else x
    for li, p in enumerate(block_params):
      hr = _block_ref(hr, p, num_head, band_width, matched, eps)
      if li == depth - 1:
        hr = _rmsnorm_ref(hr, wn_last[0], eps)
      if matched:
        hr = hr.astype(jnp.bfloat16).astype(jnp.float32)
    return _dot_ref(hr, w_out.astype(jnp.float32), matched) + b_out[0]

  ref_matched = forward_ref(True)    # bf16-matched numerics
  ref_f32 = forward_ref(False)       # full f32 (PyTorch semantics)

  def _rel_err(a, b):
    return float(jnp.max(jnp.abs(a - b))) / (float(jnp.max(jnp.abs(b))) + 1e-6)

  err_m = _rel_err(logits, ref_matched)
  err_f = _rel_err(logits, ref_f32)
  if err_m > 2e-2:
    raise AssertionError(f"mismatch vs precision-matched reference: {err_m}")
  if err_f > 5e-2:
    raise AssertionError(f"mismatch vs f32 reference: {err_f}")

  # TODO(synk): nn.Dropout is identity (eval mode); the stateful last_k/last_v
  # refresh across forward calls and multi-device block placement are not
  # modeled.  For very large Dff on v7x, add a Dff grid axis to the FFN and/or
  # pipeline_mode=pl.Buffered(1) on never-changing weight blocks.
  print("KERNEL_OK")
</pallas_src>

<mosaic_0001>
module attributes {stable_mosaic.version = 11 : i64} {
  func.func @bt_block_kernel(%arg0: i32, %arg1: i32, %arg2: memref<1x16x128xbf16, #tpu.memory_space<vmem>>, %arg3: memref<1x128xf32, #tpu.memory_space<vmem>>, %arg4: memref<128x384xbf16, #tpu.memory_space<vmem>>, %arg5: memref<128x128xbf16, #tpu.memory_space<vmem>>, %arg6: memref<3x128xf32, #tpu.memory_space<vmem>>, %arg7: memref<3x128xf32, #tpu.memory_space<vmem>>, %arg8: memref<1x128xf32, #tpu.memory_space<vmem>>, %arg9: memref<128x512xbf16, #tpu.memory_space<vmem>>, %arg10: memref<1x512xf32, #tpu.memory_space<vmem>>, %arg11: memref<256x128xbf16, #tpu.memory_space<vmem>>, %arg12: memref<1x128xf32, #tpu.memory_space<vmem>>, %arg13: memref<512x32xbf16, #tpu.memory_space<vmem>>, %arg14: memref<32x512xbf16, #tpu.memory_space<vmem>>, %arg15: memref<1x128xf32, #tpu.memory_space<vmem>>, %arg16: memref<1x16x128xbf16, #tpu.memory_space<vmem>>, %arg17: memref<3x128xf32, #tpu.memory_space<vmem>>, %arg18: memref<3x128xf32, #tpu.memory_space<vmem>>) attributes {dimension_semantics = [#tpu.dimension_semantics<parallel>, #tpu.dimension_semantics<arbitrary>], iteration_bounds = array<i64: 2, 2>, scalar_prefetch = 0 : i64, scratch_operands = 2 : i64, tpu.core_type = #tpu.core_type<tc>, window_params = [{transform_indices = @transform_0, window_bounds = array<i64: 1, 16, 128>}, {pipeline_mode = #tpu.pipeline_mode<synchronous>, transform_indices = @transform_1, window_bounds = array<i64: 1, 128>}, {pipeline_mode = #tpu.pipeline_mode<synchronous>, transform_indices = @transform_2, window_bounds = array<i64: 128, 384>}, {pipeline_mode = #tpu.pipeline_mode<synchronous>, transform_indices = @transform_3, window_bounds = array<i64: 128, 128>}, {pipeline_mode = #tpu.pipeline_mode<synchronous>, transform_indices = @transform_4, window_bounds = array<i64: 3, 128>}, {pipeline_mode = #tpu.pipeline_mode<synchronous>, transform_indices = @transform_5, window_bounds = array<i64: 3, 128>}, {pipeline_mode = #tpu.pipeline_mode<synchronous>, transform_indices = @transform_6, window_bounds = array<i64: 1, 128>}, {pipeline_mode = #tpu.pipeline_mode<synchronous>, transform_indices = @transform_7, window_bounds = array<i64: 128, 512>}, {pipeline_mode = #tpu.pipeline_mode<synchronous>, transform_indices = @transform_8, window_bounds = array<i64: 1, 512>}, {pipeline_mode = #tpu.pipeline_mode<synchronous>, transform_indices = @transform_9, window_bounds = array<i64: 256, 128>}, {pipeline_mode = #tpu.pipeline_mode<synchronous>, transform_indices = @transform_10, window_bounds = array<i64: 1, 128>}, {pipeline_mode = #tpu.pipeline_mode<synchronous>, transform_indices = @transform_11, window_bounds = array<i64: 512, 32>}, {pipeline_mode = #tpu.pipeline_mode<synchronous>, transform_indices = @transform_12, window_bounds = array<i64: 32, 512>}, {pipeline_mode = #tpu.pipeline_mode<synchronous>, transform_indices = @transform_13, window_bounds = array<i64: 1, 128>}, {transform_indices = @transform_14, window_bounds = array<i64: 1, 16, 128>}]} {
    %c0 = arith.constant 0 : index
    %c0_0 = arith.constant 0 : index
    %c0_1 = arith.constant 0 : index
    %0 = vector.load %arg2[%c0, %c0_0, %c0_1] : memref<1x16x128xbf16, #tpu.memory_space<vmem>>, vector<1x16x128xbf16>
    %1 = vector.shape_cast %0 : vector<1x16x128xbf16> to vector<16x128xbf16>
    %2 = arith.extf %1 : vector<16x128xbf16> to vector<16x128xf32>
    %3 = arith.mulf %2, %2 : vector<16x128xf32>
    %cst = arith.constant dense<0.000000e+00> : vector<16xf32>
    %4 = vector.multi_reduction <add>, %3, %cst [1] : vector<16x128xf32> to vector<16xf32>
    %5 = vector.shape_cast %4 : vector<16xf32> to vector<16x1xf32>
    %cst_2 = arith.constant 1.280000e+02 : f32
    %6 = vector.broadcast %cst_2 : f32 to vector<16x1xf32>
    %7 = arith.divf %5, %6 : vector<16x1xf32>
    %cst_3 = arith.constant 9.99999997E-7 : f32
    %8 = vector.broadcast %cst_3 : f32 to vector<16x1xf32>
    %9 = arith.addf %7, %8 : vector<16x1xf32>
    %10 = math.rsqrt %9 : vector<16x1xf32>
    %11 = vector.broadcast %10 : vector<16x1xf32> to vector<16x128xf32>
    %12 = arith.mulf %2, %11 : vector<16x128xf32>
    %c0_4 = arith.constant 0 : index
    %c0_5 = arith.constant 0 : index
    %13 = vector.load %arg3[%c0_4, %c0_5] : memref<1x128xf32, #tpu.memory_space<vmem>>, vector<1x128xf32>
    %14 = vector.shape_cast %13 : vector<1x128xf32> to vector<128xf32>
    %15 = vector.shape_cast %14 : vector<128xf32> to vector<1x128xf32>
    %16 = vector.broadcast %15 : vector<1x128xf32> to vector<16x128xf32>
    %17 = arith.mulf %12, %16 : vector<16x128xf32>
    %18 = arith.truncf %17 : vector<16x128xf32> to vector<16x128xbf16>
    %c0_6 = arith.constant 0 : index
    %c0_7 = arith.constant 0 : index
    %19 = vector.load %arg4[%c0_6, %c0_7] : memref<128x384xbf16, #tpu.memory_space<vmem>>, vector<128x384xbf16>
    %cst_8 = arith.constant dense<0.000000e+00> : vector<16x384xf32>
    %20 = tpu.matmul %18, %19, %cst_8 {dimension_numbers = #tpu.dot_dimension_numbers<[1], [0], [0], [1], [0, 0, 1, 1], [], []>} : vector<16x128xbf16>, vector<128x384xbf16>, vector<16x384xf32> -> vector<16x384xf32>
    %21 = vector.extract_strided_slice %20 {offsets = [0, 0], sizes = [16, 128], strides = [1, 1]} : vector<16x384xf32> to vector<16x128xf32>
    %22 = vector.extract_strided_slice %20 {offsets = [0, 128], sizes = [16, 128], strides = [1, 1]} : vector<16x384xf32> to vector<16x128xf32>
    %23 = vector.extract_strided_slice %20 {offsets = [0, 256], sizes = [16, 128], strides = [1, 1]} : vector<16x384xf32> to vector<16x128xf32>
    %c0_i32 = arith.constant 0 : i32
    %24 = arith.cmpi eq, %arg1, %c0_i32 : i32
    %25 = arith.extui %24 : i1 to i32
    %c0_i32_9 = arith.constant 0 : i32
    %26 = arith.cmpi ne, %25, %c0_i32_9 : i32
    scf.if %26 {
      %c0_46 = arith.constant 0 : index
      %c0_47 = arith.constant 0 : index
      %130 = vector.load %arg6[%c0_46, %c0_47] : memref<3x128xf32, #tpu.memory_space<vmem>>, vector<3x128xf32>
      %c0_48 = arith.constant 0 : index
      %c0_49 = arith.constant 0 : index
      %131 = vector.load %arg17[%c0_48, %c0_49] : memref<3x128xf32, #tpu.memory_space<vmem>>, vector<3x128xf32>
      tpu.vector_store %arg17[%c0_48, %c0_49], %130 {strides = array<i32>} : memref<3x128xf32, #tpu.memory_space<vmem>>, vector<3x128xf32>,
      %c0_50 = arith.constant 0 : index
      %c0_51 = arith.constant 0 : index
      %132 = vector.load %arg7[%c0_50, %c0_51] : memref<3x128xf32, #tpu.memory_space<vmem>>, vector<3x128xf32>
      %c0_52 = arith.constant 0 : index
      %c0_53 = arith.constant 0 : index
      %133 = vector.load %arg18[%c0_52, %c0_53] : memref<3x128xf32, #tpu.memory_space<vmem>>, vector<3x128xf32>
      tpu.vector_store %arg18[%c0_52, %c0_53], %132 {strides = array<i32>} : memref<3x128xf32, #tpu.memory_space<vmem>>, vector<3x128xf32>,
    } else {
    }
    %c0_10 = arith.constant 0 : index
    %c0_11 = arith.constant 0 : index
    %27 = vector.load %arg17[%c0_10, %c0_11] : memref<3x128xf32, #tpu.memory_space<vmem>>, vector<3x128xf32>
    %28 = tpu.concatenate %27, %22 in 0 : vector<3x128xf32>, vector<16x128xf32> -> vector<19x128xf32>
    %c0_12 = arith.constant 0 : index
    %c0_13 = arith.constant 0 : index
    %29 = vector.load %arg18[%c0_12, %c0_13] : memref<3x128xf32, #tpu.memory_space<vmem>>, vector<3x128xf32>
    %30 = tpu.concatenate %29, %23 in 0 : vector<3x128xf32>, vector<16x128xf32> -> vector<19x128xf32>
    %31 = vector.extract_strided_slice %22 {offsets = [13, 0], sizes = [3, 128], strides = [1, 1]} : vector<16x128xf32> to vector<3x128xf32>
    %c0_14 = arith.constant 0 : index
    %c0_15 = arith.constant 0 : index
    %32 = vector.load %arg17[%c0_14, %c0_15] : memref<3x128xf32, #tpu.memory_space<vmem>>, vector<3x128xf32>
    tpu.vector_store %arg17[%c0_14, %c0_15], %31 {strides = array<i32>} : memref<3x128xf32, #tpu.memory_space<vmem>>, vector<3x128xf32>,
    %33 = vector.extract_strided_slice %23 {offsets = [13, 0], sizes = [3, 128], strides = [1, 1]} : vector<16x128xf32> to vector<3x128xf32>
    %c0_16 = arith.constant 0 : index
    %c0_17 = arith.constant 0 : index
    %34 = vector.load %arg18[%c0_16, %c0_17] : memref<3x128xf32, #tpu.memory_space<vmem>>, vector<3x128xf32>
    tpu.vector_store %arg18[%c0_16, %c0_17], %33 {strides = array<i32>} : memref<3x128xf32, #tpu.memory_space<vmem>>, vector<3x128xf32>,
    %35 = tpu.concatenate %21, %21, %21, %21 in 1 : vector<16x128xf32>, vector<16x128xf32>, vector<16x128xf32>, vector<16x128xf32> -> vector<16x512xf32>
    %36 = vector.extract_strided_slice %28 {offsets = [0, 0], sizes = [16, 128], strides = [1, 1]} : vector<19x128xf32> to vector<16x128xf32>
    %37 = vector.extract_strided_slice %28 {offsets = [1, 0], sizes = [16, 128], strides = [1, 1]} : vector<19x128xf32> to vector<16x128xf32>
    %38 = vector.extract_strided_slice %28 {offsets = [2, 0], sizes = [16, 128], strides = [1, 1]} : vector<19x128xf32> to vector<16x128xf32>
    %39 = vector.extract_strided_slice %28 {offsets = [3, 0], sizes = [16, 128], strides = [1, 1]} : vector<19x128xf32> to vector<16x128xf32>
    %40 = tpu.concatenate %36, %37, %38, %39 in 1 : vector<16x128xf32>, vector<16x128xf32>, vector<16x128xf32>, vector<16x128xf32> -> vector<16x512xf32>
    %41 = arith.mulf %35, %40 : vector<16x512xf32>
    %42 = arith.truncf %41 : vector<16x512xf32> to vector<16x512xbf16>
    %c0_18 = arith.constant 0 : index
    %c0_19 = arith.constant 0 : index
    %43 = vector.load %arg13[%c0_18, %c0_19] : memref<512x32xbf16, #tpu.memory_space<vmem>>, vector<512x32xbf16>
    %cst_20 = arith.constant dense<0.000000e+00> : vector<16x32xf32>
    %44 = tpu.matmul %42, %43, %cst_20 {dimension_numbers = #tpu.dot_dimension_numbers<[1], [0], [0], [1], [0, 0, 1, 1], [], []>} : vector<16x512xbf16>, vector<512x32xbf16>, vector<16x32xf32> -> vector<16x32xf32>
    %45 = vector.extract_strided_slice %44 {offsets = [0, 0], sizes = [16, 8], strides = [1, 1]} : vector<16x32xf32> to vector<16x8xf32>
    %46 = vector.extract_strided_slice %44 {offsets = [0, 8], sizes = [16, 8], strides = [1, 1]} : vector<16x32xf32> to vector<16x8xf32>
    %47 = arith.maximumf %45, %46 : vector<16x8xf32>
    %48 = vector.extract_strided_slice %44 {offsets = [0, 16], sizes = [16, 8], strides = [1, 1]} : vector<16x32xf32> to vector<16x8xf32>
    %49 = arith.maximumf %47, %48 : vector<16x8xf32>
    %50 = vector.extract_strided_slice %44 {offsets = [0, 24], sizes = [16, 8], strides = [1, 1]} : vector<16x32xf32> to vector<16x8xf32>
    %51 = arith.maximumf %49, %50 : vector<16x8xf32>
    %52 = tpu.concatenate %51, %51, %51, %51 in 1 : vector<16x8xf32>, vector<16x8xf32>, vector<16x8xf32>, vector<16x8xf32> -> vector<16x32xf32>
    %53 = arith.subf %44, %52 : vector<16x32xf32>
    %54 = math.exp %53 : vector<16x32xf32>
    %55 = vector.extract_strided_slice %54 {offsets = [0, 0], sizes = [16, 8], strides = [1, 1]} : vector<16x32xf32> to vector<16x8xf32>
    %56 = vector.extract_strided_slice %54 {offsets = [0, 8], sizes = [16, 8], strides = [1, 1]} : vector<16x32xf32> to vector<16x8xf32>
    %57 = arith.addf %55, %56 : vector<16x8xf32>
    %58 = vector.extract_strided_slice %54 {offsets = [0, 16], sizes = [16, 8], strides = [1, 1]} : vector<16x32xf32> to vector<16x8xf32>
    %59 = arith.addf %57, %58 : vector<16x8xf32>
    %60 = vector.extract_strided_slice %54 {offsets = [0, 24], sizes = [16, 8], strides = [1, 1]} : vector<16x32xf32> to vector<16x8xf32>
    %61 = arith.addf %59, %60 : vector<16x8xf32>
    %62 = tpu.reciprocal %61 {approx = true} : vector<16x8xf32> -> vector<16x8xf32>
    %63 = tpu.concatenate %62, %62, %62, %62 in 1 : vector<16x8xf32>, vector<16x8xf32>, vector<16x8xf32>, vector<16x8xf32> -> vector<16x32xf32>
    %64 = arith.mulf %54, %63 : vector<16x32xf32>
    %65 = arith.truncf %64 : vector<16x32xf32> to vector<16x32xbf16>
    %c0_21 = arith.constant 0 : index
    %c0_22 = arith.constant 0 : index
    %66 = vector.load %arg14[%c0_21, %c0_22] : memref<32x512xbf16, #tpu.memory_space<vmem>>, vector<32x512xbf16>
    %cst_23 = arith.constant dense<0.000000e+00> : vector<16x512xf32>
    %67 = tpu.matmul %65, %66, %cst_23 {dimension_numbers = #tpu.dot_dimension_numbers<[1], [0], [0], [1], [0, 0, 1, 1], [], []>} : vector<16x32xbf16>, vector<32x512xbf16>, vector<16x512xf32> -> vector<16x512xf32>
    %68 = vector.extract_strided_slice %30 {offsets = [0, 0], sizes = [16, 128], strides = [1, 1]} : vector<19x128xf32> to vector<16x128xf32>
    %69 = vector.extract_strided_slice %30 {offsets = [1, 0], sizes = [16, 128], strides = [1, 1]} : vector<19x128xf32> to vector<16x128xf32>
    %70 = vector.extract_strided_slice %30 {offsets = [2, 0], sizes = [16, 128], strides = [1, 1]} : vector<19x128xf32> to vector<16x128xf32>
    %71 = vector.extract_strided_slice %30 {offsets = [3, 0], sizes = [16, 128], strides = [1, 1]} : vector<19x128xf32> to vector<16x128xf32>
    %72 = tpu.concatenate %68, %69, %70, %71 in 1 : vector<16x128xf32>, vector<16x128xf32>, vector<16x128xf32>, vector<16x128xf32> -> vector<16x512xf32>
    %73 = arith.mulf %67, %72 : vector<16x512xf32>
    %74 = vector.extract_strided_slice %73 {offsets = [0, 0], sizes = [16, 128], strides = [1, 1]} : vector<16x512xf32> to vector<16x128xf32>
    %75 = vector.extract_strided_slice %73 {offsets = [0, 128], sizes = [16, 128], strides = [1, 1]} : vector<16x512xf32> to vector<16x128xf32>
    %76 = arith.addf %74, %75 : vector<16x128xf32>
    %77 = vector.extract_strided_slice %73 {offsets = [0, 256], sizes = [16, 128], strides = [1, 1]} : vector<16x512xf32> to vector<16x128xf32>
    %78 = arith.addf %76, %77 : vector<16x128xf32>
    %79 = vector.extract_strided_slice %73 {offsets = [0, 384], sizes = [16, 128], strides = [1, 1]} : vector<16x512xf32> to vector<16x128xf32>
    %80 = arith.addf %78, %79 : vector<16x128xf32>
    %81 = arith.truncf %80 : vector<16x128xf32> to vector<16x128xbf16>
    %c0_24 = arith.constant 0 : index
    %c0_25 = arith.constant 0 : index
    %82 = vector.load %arg5[%c0_24, %c0_25] : memref<128x128xbf16, #tpu.memory_space<vmem>>, vector<128x128xbf16>
    %cst_26 = arith.constant dense<0.000000e+00> : vector<16x128xf32>
    %83 = tpu.matmul %81, %82, %cst_26 {dimension_numbers = #tpu.dot_dimension_numbers<[1], [0], [0], [1], [0, 0, 1, 1], [], []>} : vector<16x128xbf16>, vector<128x128xbf16>, vector<16x128xf32> -> vector<16x128xf32>
    %84 = arith.addf %2, %83 : vector<16x128xf32>
    %85 = arith.mulf %84, %84 : vector<16x128xf32>
    %cst_27 = arith.constant dense<0.000000e+00> : vector<16xf32>
    %86 = vector.multi_reduction <add>, %85, %cst_27 [1] : vector<16x128xf32> to vector<16xf32>
    %87 = vector.shape_cast %86 : vector<16xf32> to vector<16x1xf32>
    %cst_28 = arith.constant 1.280000e+02 : f32
    %88 = vector.broadcast %cst_28 : f32 to vector<16x1xf32>
    %89 = arith.divf %87, %88 : vector<16x1xf32>
    %cst_29 = arith.constant 9.99999997E-7 : f32
    %90 = vector.broadcast %cst_29 : f32 to vector<16x1xf32>
    %91 = arith.addf %89, %90 : vector<16x1xf32>
    %92 = math.rsqrt %91 : vector<16x1xf32>
    %93 = vector.broadcast %92 : vector<16x1xf32> to vector<16x128xf32>
    %94 = arith.mulf %84, %93 : vector<16x128xf32>
    %c0_30 = arith.constant 0 : index
    %c0_31 = arith.constant 0 : index
    %95 = vector.load %arg8[%c0_30, %c0_31] : memref<1x128xf32, #tpu.memory_space<vmem>>, vector<1x128xf32>
    %96 = vector.shape_cast %95 : vector<1x128xf32> to vector<128xf32>
    %97 = vector.shape_cast %96 : vector<128xf32> to vector<1x128xf32>
    %98 = vector.broadcast %97 : vector<1x128xf32> to vector<16x128xf32>
    %99 = arith.mulf %94, %98 : vector<16x128xf32>
    %100 = arith.truncf %99 : vector<16x128xf32> to vector<16x128xbf16>
    %c0_32 = arith.constant 0 : index
    %c0_33 = arith.constant 0 : index
    %101 = vector.load %arg9[%c0_32, %c0_33] : memref<128x512xbf16, #tpu.memory_space<vmem>>, vector<128x512xbf16>
    %cst_34 = arith.constant dense<0.000000e+00> : vector<16x512xf32>
    %102 = tpu.matmul %100, %101, %cst_34 {dimension_numbers = #tpu.dot_dimension_numbers<[1], [0], [0], [1], [0, 0, 1, 1], [], []>} : vector<16x128xbf16>, vector<128x512xbf16>, vector<16x512xf32> -> vector<16x512xf32>
    %c0_35 = arith.constant 0 : index
    %c0_36 = arith.constant 0 : index
    %103 = vector.load %arg10[%c0_35, %c0_36] : memref<1x512xf32, #tpu.memory_space<vmem>>, vector<1x512xf32>
    %104 = vector.shape_cast %103 : vector<1x512xf32> to vector<512xf32>
    %105 = vector.shape_cast %104 : vector<512xf32> to vector<1x512xf32>
    %106 = vector.broadcast %105 : vector<1x512xf32> to vector<16x512xf32>
    %107 = arith.addf %102, %106 : vector<16x512xf32>
    %108 = vector.extract_strided_slice %107 {offsets = [0, 0], sizes = [16, 256], strides = [1, 1]} : vector<16x512xf32> to vector<16x256xf32>
    %109 = vector.extract_strided_slice %107 {offsets = [0, 256], sizes = [16, 256], strides = [1, 1]} : vector<16x512xf32> to vector<16x256xf32>
    %110 = arith.negf %109 : vector<16x256xf32>
    %111 = math.exp %110 : vector<16x256xf32>
    %cst_37 = arith.constant 1.000000e+00 : f32
    %112 = vector.broadcast %cst_37 : f32 to vector<16x256xf32>
    %113 = arith.addf %112, %111 : vector<16x256xf32>
    %114 = arith.divf %112, %113 : vector<16x256xf32>
    %115 = arith.mulf %109, %114 : vector<16x256xf32>
    %116 = arith.mulf %108, %115 : vector<16x256xf32>
    %117 = arith.truncf %116 : vector<16x256xf32> to vector<16x256xbf16>
    %c0_38 = arith.constant 0 : index
    %c0_39 = arith.constant 0 : index
    %118 = vector.load %arg11[%c0_38, %c0_39] : memref<256x128xbf16, #tpu.memory_space<vmem>>, vector<256x128xbf16>
    %cst_40 = arith.constant dense<0.000000e+00> : vector<16x128xf32>
    %119 = tpu.matmul %117, %118, %cst_40 {dimension_numbers = #tpu.dot_dimension_numbers<[1], [0], [0], [1], [0, 0, 1, 1], [], []>} : vector<16x256xbf16>, vector<256x128xbf16>, vector<16x128xf32> -> vector<16x128xf32>
    %c0_41 = arith.constant 0 : index
    %c0_42 = arith.constant 0 : index
    %120 = vector.load %arg12[%c0_41, %c0_42] : memref<1x128xf32, #tpu.memory_space<vmem>>, vector<1x128xf32>
    %121 = vector.shape_cast %120 : vector<1x128xf32> to vector<128xf32>
    %122 = vector.shape_cast %121 : vector<128xf32> to vector<1x128xf32>
    %123 = vector.broadcast %122 : vector<1x128xf32> to vector<16x128xf32>
    %124 = arith.addf %119, %123 : vector<16x128xf32>
    %125 = arith.addf %84, %124 : vector<16x128xf32>
    %126 = arith.truncf %125 : vector<16x128xf32> to vector<16x128xbf16>
    %c0_43 = arith.constant 0 : index
    %c0_44 = arith.constant 0 : index
    %c0_45 = arith.constant 0 : index
    %127 = vector.load %arg16[%c0_43, %c0_44, %c0_45] : memref<1x16x128xbf16, #tpu.memory_space<vmem>>, vector<1x16x128xbf16>
    %128 = vector.shape_cast %127 : vector<1x16x128xbf16> to vector<16x128xbf16>
    %129 = vector.shape_cast %126 : vector<16x128xbf16> to vector<1x16x128xbf16>
    tpu.vector_store %arg16[%c0_43, %c0_44, %c0_45], %129 {strides = array<i32>} : memref<1x16x128xbf16, #tpu.memory_space<vmem>>, vector<1x16x128xbf16>,
    return
  }
  func.func @transform_0(%arg0: i32, %arg1: i32) -> (i32, i32, i32) {
    %c0_i32 = arith.constant 0 : i32
    %c0_i32_0 = arith.constant 0 : i32
    return %arg0, %arg1, %c0_i32 : i32, i32, i32
  }
  func.func @transform_1(%arg0: i32, %arg1: i32) -> (i32, i32) {
    %c0_i32 = arith.constant 0 : i32
    %c0_i32_0 = arith.constant 0 : i32
    %c0_i32_1 = arith.constant 0 : i32
    return %c0_i32, %c0_i32_0 : i32, i32
  }
  func.func @transform_2(%arg0: i32, %arg1: i32) -> (i32, i32) {
    %c0_i32 = arith.constant 0 : i32
    %c0_i32_0 = arith.constant 0 : i32
    %c0_i32_1 = arith.constant 0 : i32
    return %c0_i32, %c0_i32_0 : i32, i32
  }
  func.func @transform_3(%arg0: i32, %arg1: i32) -> (i32, i32) {
    %c0_i32 = arith.constant 0 : i32
    %c0_i32_0 = arith.constant 0 : i32
    %c0_i32_1 = arith.constant 0 : i32
    return %c0_i32, %c0_i32_0 : i32, i32
  }
  func.func @transform_4(%arg0: i32, %arg1: i32) -> (i32, i32) {
    %c0_i32 = arith.constant 0 : i32
    %c0_i32_0 = arith.constant 0 : i32
    %c0_i32_1 = arith.constant 0 : i32
    return %c0_i32, %c0_i32_0 : i32, i32
  }
  func.func @transform_5(%arg0: i32, %arg1: i32) -> (i32, i32) {
    %c0_i32 = arith.constant 0 : i32
    %c0_i32_0 = arith.constant 0 : i32
    %c0_i32_1 = arith.constant 0 : i32
    return %c0_i32, %c0_i32_0 : i32, i32
  }
  func.func @transform_6(%arg0: i32, %arg1: i32) -> (i32, i32) {
    %c0_i32 = arith.constant 0 : i32
    %c0_i32_0 = arith.constant 0 : i32
    %c0_i32_1 = arith.constant 0 : i32
    return %c0_i32, %c0_i32_0 : i32, i32
  }
  func.func @transform_7(%arg0: i32, %arg1: i32) -> (i32, i32) {
    %c0_i32 = arith.constant 0 : i32
    %c0_i32_0 = arith.constant 0 : i32
    %c0_i32_1 = arith.constant 0 : i32
    return %c0_i32, %c0_i32_0 : i32, i32
  }
  func.func @transform_8(%arg0: i32, %arg1: i32) -> (i32, i32) {
    %c0_i32 = arith.constant 0 : i32
    %c0_i32_0 = arith.constant 0 : i32
    %c0_i32_1 = arith.constant 0 : i32
    return %c0_i32, %c0_i32_0 : i32, i32
  }
  func.func @transform_9(%arg0: i32, %arg1: i32) -> (i32, i32) {
    %c0_i32 = arith.constant 0 : i32
    %c0_i32_0 = arith.constant 0 : i32
    %c0_i32_1 = arith.constant 0 : i32
    return %c0_i32, %c0_i32_0 : i32, i32
  }
  func.func @transform_10(%arg0: i32, %arg1: i32) -> (i32, i32) {
    %c0_i32 = arith.constant 0 : i32
    %c0_i32_0 = arith.constant 0 : i32
    %c0_i32_1 = arith.constant 0 : i32
    return %c0_i32, %c0_i32_0 : i32, i32
  }
  func.func @transform_11(%arg0: i32, %arg1: i32) -> (i32, i32) {
    %c0_i32 = arith.constant 0 : i32
    %c0_i32_0 = arith.constant 0 : i32
    %c0_i32_1 = arith.constant 0 : i32
    return %c0_i32, %c0_i32_0 : i32, i32
  }
  func.func @transform_12(%arg0: i32, %arg1: i32) -> (i32, i32) {
    %c0_i32 = arith.constant 0 : i32
    %c0_i32_0 = arith.constant 0 : i32
    %c0_i32_1 = arith.constant 0 : i32
    return %c0_i32, %c0_i32_0 : i32, i32
  }
  func.func @transform_13(%arg0: i32, %arg1: i32) -> (i32, i32) {
    %c0_i32 = arith.constant 0 : i32
    %c0_i32_0 = arith.constant 0 : i32
    %c0_i32_1 = arith.constant 0 : i32
    return %c0_i32, %c0_i32_0 : i32, i32
  }
  func.func @transform_14(%arg0: i32, %arg1: i32) -> (i32, i32, i32) {
    %c0_i32 = arith.constant 0 : i32
    %c0_i32_0 = arith.constant 0 : i32
    return %arg0, %arg1, %c0_i32 : i32, i32, i32
  }
}

</mosaic_0001>

<llo_original>
// kernel: tpu_custom_call.1
$region0: #{tpu_custom_call.1}
  #allocation0 [shape = 'u32[]', space=smem, size = 0x4, offset = 0x4, fixed_abs, tag = 'smem constant byte address 0x4 - core index']
  #allocation1 [shape = 'u32[144,128]{1,0:T(1,128)}', space=vmem, size = 0x12000, scoped, tag = 'internal scratch']
  #allocation2 [shape = 'f32[3,128]{1,0:T(4,128)}', space=vmem, size = 0x800, scoped, tag = 'scratch operand']
  #allocation3 [shape = 'f32[3,128]{1,0:T(4,128)}', space=vmem, size = 0x800, scoped, tag = 'scratch operand']
  %s0 = inlined_call_operand.hbm [shape: bf16[2,32,128], index: 0, kind: input, shape index: {}]
  %s1 = inlined_call_operand.vmem [shape: f32[1,128], index: 1, kind: input, shape index: {}]
  %s2 = inlined_call_operand.hbm [shape: bf16[128,384], index: 2, kind: input, shape index: {}]
  %s3 = inlined_call_operand.vmem [shape: bf16[128,128], index: 3, kind: input, shape index: {}]
  %s4 = inlined_call_operand.vmem [shape: f32[3,128], index: 4, kind: input, shape index: {}]
  %s5 = inlined_call_operand.vmem [shape: f32[3,128], index: 5, kind: input, shape index: {}]
  %s6 = inlined_call_operand.vmem [shape: f32[1,128], index: 6, kind: input, shape index: {}]
  %s7 = inlined_call_operand.vmem [shape: bf16[128,512], index: 7, kind: input, shape index: {}]
  %s8 = inlined_call_operand.vmem [shape: f32[1,512], index: 8, kind: input, shape index: {}]
  %s9 = inlined_call_operand.hbm [shape: bf16[256,128], index: 9, kind: input, shape index: {}]
  %s10 = inlined_call_operand.vmem [shape: f32[1,128], index: 10, kind: input, shape index: {}]
  %s11 = inlined_call_operand.vmem [shape: bf16[512,32], index: 11, kind: input, shape index: {}]
  %s12 = inlined_call_operand.hbm [shape: bf16[32,512], index: 12, kind: input, shape index: {}]
  %s13 = inlined_call_operand.vmem [shape: f32[1,128], index: 13, kind: input, shape index: {}]
  %s14 = inlined_call_operand.hbm [shape: bf16[2,32,128], index: 14, kind: output, shape index: {}]
  %s15 = sld [smem:[#allocation0]]
  $region109: #{tpu_custom_call.1} parent=0
    _
  %s17 = ssub.s32 1, %s15
  %s18 = scalar_select 0, %s17, %s15
  $region1: #{tpu_custom_call.1} parent=0
    #allocation4 [shape = 'u8[8192]{0}', space=vmem, size = 0x2000, scoped, tag = 'input window, operand 0']
    #allocation5 [shape = 's32[2]{0}', space=sflag, size = 0x8, scoped, tag = 'scoped memory for tpu_custom_call.1']
    #allocation6 [shape = 's32[2]{0}', space=sflag, size = 0x8, scoped, tag = 'scoped memory for tpu_custom_call.1']
    #allocation7 [shape = 'u8[98304]{0}', space=vmem, size = 0x18000, scoped, tag = 'input window, operand 2, single buffered']
    #allocation8 [shape = 's32[1]{0}', space=sflag, size = 0x4, scoped, tag = 'scoped memory for tpu_custom_call.1']
    #allocation9 [shape = 'u8[65536]{0}', space=vmem, size = 0x10000, scoped, tag = 'input window, operand 9, single buffered']
    #allocation10 [shape = 'u8[32768]{0}', space=vmem, size = 0x8000, scoped, tag = 'input window, operand 12, single buffered']
    #allocation11 [shape = 's32[1]{0}', space=sflag, size = 0x4, scoped, tag = 'scoped memory for tpu_custom_call.1']
    #allocation12 [shape = 'u8[8192]{0}', space=vmem, size = 0x2000, scoped, tag = 'output window, operand 0']
    %19 = vsyncpa [#allocation5], 0
    %s20 = scalar_lea.sflag [#allocation5], 1
    %21 = vsyncpa %s20, 0
    %22 = vsyncpa [#allocation8], 0
    %23 = vsyncpa [#allocation11], 0
    %24 = vsyncpa [#allocation6], 0
    %s25 = scalar_lea.sflag [#allocation6], 1
    %26 = vsyncpa %s25, 0
    loop: start=0, step=1, limit=6
    $region2: #{tpu_custom_call.1} parent=1 // loop_pre_header
      _
    $region3: #{tpu_custom_call.1} parent=1 // loop_header
      %s28 = sphi 0, %s32
      %p29 = scmp.ge.s32.totalorder %s28, 6
      %s35 = sphi 0, %s47
      %s36 = sphi 0, %s43
      %s37 = sphi 0, %s35
      %s38 = sphi 0, %s36
      %s39 = sphi 0, %s37
      %s40 = sphi 0, %s38
      %s52 = sphi 0, %s54
      %s55 = sphi 0, %s52
      %s56 = sphi 0, %s55
      %s72 = sphi 0, %s56
      %s76 = sphi 0, %s76
      %s78 = sphi 0, %s76
      %s79 = sphi 0, %s78
      %s93 = sphi 0, %s79
      %s97 = sphi 0, %s97
      %s99 = sphi 0, %s97
      %s100 = sphi 0, %s99
      %s114 = sphi 0, %s100
      %s118 = sphi 0, %s118
      %s120 = sphi 0, %s118
      %s121 = sphi 0, %s120
      %s135 = sphi 0, %s121
      %s139 = sphi 0, %s139
      %s141 = sphi 0, %s139
      %s142 = sphi 0, %s141
      %s156 = sphi 0, %s142
      %s160 = sphi 0, %s160
      %s162 = sphi 0, %s160
      %s163 = sphi 0, %s162
      %s177 = sphi 0, %s163
      %s181 = sphi 0, %s181
      %s183 = sphi 0, %s181
      %s184 = sphi 0, %s183
      %s198 = sphi 0, %s184
      %s202 = sphi 0, %s202
      %s204 = sphi 0, %s202
      %s205 = sphi 0, %s204
      %s219 = sphi 0, %s205
      %s223 = sphi 0, %s223
      %s225 = sphi 0, %s223
      %s226 = sphi 0, %s225
      %s240 = sphi 0, %s226
      %s244 = sphi 0, %s244
      %s246 = sphi 0, %s244
      %s247 = sphi 0, %s246
      %s261 = sphi 0, %s247
      %s265 = sphi 0, %s265
      %s267 = sphi 0, %s265
      %s268 = sphi 0, %s267
      %s282 = sphi 0, %s268
      %s286 = sphi 0, %s286
      %s288 = sphi 0, %s286
      %s289 = sphi 0, %s288
      %s303 = sphi 0, %s289
      %s307 = sphi 0, %s307
      %s309 = sphi 0, %s307
      %s310 = sphi 0, %s309
      %s324 = sphi 0, %s310
      %s328 = sphi 0, %s328
      %s330 = sphi 0, %s328
      %s331 = sphi 0, %s330
      %s345 = sphi 0, %s331
      %s353 = sphi 0, %s355
      %s356 = sphi 0, %s353
      %s357 = sphi 0, %s356
      %s373 = sphi 0, %s357
    $region4: #{tpu_custom_call.1} parent=1 // loop_header_branch
      %31 = sbr.rel (%p29) target = $region8
    $region5: #{tpu_custom_call.1} parent=1 // loop_body
      %s33 = ssub.s32 %s28, 1
      %s34 = ssub.s32 %s28, 2
      %s41 = sadd.s32 1, %s36
      %p42 = scmp.ge.s32.totalorder %s41, 2
      %s43 = scalar_select %p42, 0, %s41
      %s44 = sadd.s32 1, %s35
      %s45 = scalar_select %p42, %s44, %s35
      %p46 = scmp.ge.s32.totalorder %s45, 2
      %s47 = scalar_select %p46, 0, %s45
      %s48 = ssub.s32 %s35, %s47
      %s49 = ssub.s32 %s36, %s43
      %s50 = sor.u32 %s48, %s49
      %p51 = scmp.eq.s32.totalorder %s50, 0
      %s53 = sadd.s32 %s52, 1
      %s54 = scalar_select %p51, %s52, %s53
      %p57 = pneg %p51
      %p58 = scmp.eq.s32.totalorder %s28, 3
      %p59 = por %p57, %p58
      %p60 = scmp.ne.s32.totalorder %s52, %s55
      %p61 = scmp.eq.s32.totalorder %s28, 0
      %p62 = por %p60, %p61
      %p63 = scmp.ne.s32.totalorder %s52, %s55
      %p64 = scmp.eq.s32.totalorder %s33, 3
      %p65 = por %p63, %p64
      %p66 = scmp.ne.s32.totalorder %s55, %s56
      %p67 = scmp.eq.s32.totalorder %s33, 0
      %p68 = por %p66, %p67
      %p69 = scmp.ne.s32.totalorder %s55, %s56
      %p70 = scmp.eq.s32.totalorder %s34, 3
      %p71 = por %p69, %p70
      %p73 = scmp.ne.s32.totalorder %s56, %s72
      %p74 = scmp.eq.s32.totalorder %s34, 0
      %p75 = por %p73, %p74
      %s77 = sadd.s32 %s76, 1
      %p80 = scmp.eq.s32.totalorder %s28, 3
      %p81 = scmp.ne.s32.totalorder %s76, %s78
      %p82 = scmp.eq.s32.totalorder %s28, 0
      %p83 = por %p81, %p82
      %p84 = scmp.ne.s32.totalorder %s76, %s78
      %p85 = scmp.eq.s32.totalorder %s33, 3
      %p86 = por %p84, %p85
      %p87 = scmp.ne.s32.totalorder %s78, %s79
      %p88 = scmp.eq.s32.totalorder %s33, 0
      %p89 = por %p87, %p88
      %p90 = scmp.ne.s32.totalorder %s78, %s79
      %p91 = scmp.eq.s32.totalorder %s34, 3
      %p92 = por %p90, %p91
      %p94 = scmp.ne.s32.totalorder %s79, %s93
      %p95 = scmp.eq.s32.totalorder %s34, 0
      %p96 = por %p94, %p95
      %s98 = sadd.s32 %s97, 1
      %p101 = scmp.eq.s32.totalorder %s28, 3
      %p102 = scmp.ne.s32.totalorder %s97, %s99
      %p103 = scmp.eq.s32.totalorder %s28, 0
      %p104 = por %p102, %p103
      %p105 = scmp.ne.s32.totalorder %s97, %s99
      %p106 = scmp.eq.s32.totalorder %s33, 3
      %p107 = por %p105, %p106
      %p108 = scmp.ne.s32.totalorder %s99, %s100
      %p109 = scmp.eq.s32.totalorder %s33, 0
      %p110 = por %p108, %p109
      %p111 = scmp.ne.s32.totalorder %s99, %s100
      %p112 = scmp.eq.s32.totalorder %s34, 3
      %p113 = por %p111, %p112
      %p115 = scmp.ne.s32.totalorder %s100, %s114
      %p116 = scmp.eq.s32.totalorder %s34, 0
      %p117 = por %p115, %p116
      %s119 = sadd.s32 %s118, 1
      %p122 = scmp.eq.s32.totalorder %s28, 3
      %p123 = scmp.ne.s32.totalorder %s118, %s120
      %p124 = scmp.eq.s32.totalorder %s28, 0
      %p125 = por %p123, %p124
      %p126 = scmp.ne.s32.totalorder %s118, %s120
      %p127 = scmp.eq.s32.totalorder %s33, 3
      %p128 = por %p126, %p127
      %p129 = scmp.ne.s32.totalorder %s120, %s121
      %p130 = scmp.eq.s32.totalorder %s33, 0
      %p131 = por %p129, %p130
      %p132 = scmp.ne.s32.totalorder %s120, %s121
      %p133 = scmp.eq.s32.totalorder %s34, 3
      %p134 = por %p132, %p133
      %p136 = scmp.ne.s32.totalorder %s121, %s135
      %p137 = scmp.eq.s32.totalorder %s34, 0
      %p138 = por %p136, %p137
      %s140 = sadd.s32 %s139, 1
      %p143 = scmp.eq.s32.totalorder %s28, 3
      %p144 = scmp.ne.s32.totalorder %s139, %s141
      %p145 = scmp.eq.s32.totalorder %s28, 0
      %p146 = por %p144, %p145
      %p147 = scmp.ne.s32.totalorder %s139, %s141
      %p148 = scmp.eq.s32.totalorder %s33, 3
      %p149 = por %p147, %p148
      %p150 = scmp.ne.s32.totalorder %s141, %s142
      %p151 = scmp.eq.s32.totalorder %s33, 0
      %p152 = por %p150, %p151
      %p153 = scmp.ne.s32.totalorder %s141, %s142
      %p154 = scmp.eq.s32.totalorder %s34, 3
      %p155 = por %p153, %p154
      %p157 = scmp.ne.s32.totalorder %s142, %s156
      %p158 = scmp.eq.s32.totalorder %s34, 0
      %p159 = por %p157, %p158
      %s161 = sadd.s32 %s160, 1
      %p164 = scmp.eq.s32.totalorder %s28, 3
      %p165 = scmp.ne.s32.totalorder %s160, %s162
      %p166 = scmp.eq.s32.totalorder %s28, 0
      %p167 = por %p165, %p166
      %p168 = scmp.ne.s32.totalorder %s160, %s162
      %p169 = scmp.eq.s32.totalorder %s33, 3
      %p170 = por %p168, %p169
      %p171 = scmp.ne.s32.totalorder %s162, %s163
      %p172 = scmp.eq.s32.totalorder %s33, 0
      %p173 = por %p171, %p172
      %p174 = scmp.ne.s32.totalorder %s162, %s163
      %p175 = scmp.eq.s32.totalorder %s34, 3
      %p176 = por %p174, %p175
      %p178 = scmp.ne.s32.totalorder %s163, %s177
      %p179 = scmp.eq.s32.totalorder %s34, 0
      %p180 = por %p178, %p179
      %s182 = sadd.s32 %s181, 1
      %p185 = scmp.eq.s32.totalorder %s28, 3
      %p186 = scmp.ne.s32.totalorder %s181, %s183
      %p187 = scmp.eq.s32.totalorder %s28, 0
      %p188 = por %p186, %p187
      %p189 = scmp.ne.s32.totalorder %s181, %s183
      %p190 = scmp.eq.s32.totalorder %s33, 3
      %p191 = por %p189, %p190
      %p192 = scmp.ne.s32.totalorder %s183, %s184
      %p193 = scmp.eq.s32.totalorder %s33, 0
      %p194 = por %p192, %p193
      %p195 = scmp.ne.s32.totalorder %s183, %s184
      %p196 = scmp.eq.s32.totalorder %s34, 3
      %p197 = por %p195, %p196
      %p199 = scmp.ne.s32.totalorder %s184, %s198
      %p200 = scmp.eq.s32.totalorder %s34, 0
      %p201 = por %p199, %p200
      %s203 = sadd.s32 %s202, 1
      %p206 = scmp.eq.s32.totalorder %s28, 3
      %p207 = scmp.ne.s32.totalorder %s202, %s204
      %p208 = scmp.eq.s32.totalorder %s28, 0
      %p209 = por %p207, %p208
      %p210 = scmp.ne.s32.totalorder %s202, %s204
      %p211 = scmp.eq.s32.totalorder %s33, 3
      %p212 = por %p210, %p211
      %p213 = scmp.ne.s32.totalorder %s204, %s205
      %p214 = scmp.eq.s32.totalorder %s33, 0
      %p215 = por %p213, %p214
      %p216 = scmp.ne.s32.totalorder %s204, %s205
      %p217 = scmp.eq.s32.totalorder %s34, 3
      %p218 = por %p216, %p217
      %p220 = scmp.ne.s32.totalorder %s205, %s219
      %p221 = scmp.eq.s32.totalorder %s34, 0
      %p222 = por %p220, %p221
      %s224 = sadd.s32 %s223, 1
      %p227 = scmp.eq.s32.totalorder %s28, 3
      %p228 = scmp.ne.s32.totalorder %s223, %s225
      %p229 = scmp.eq.s32.totalorder %s28, 0
      %p230 = por %p228, %p229
      %p231 = scmp.ne.s32.totalorder %s223, %s225
      %p232 = scmp.eq.s32.totalorder %s33, 3
      %p233 = por %p231, %p232
      %p234 = scmp.ne.s32.totalorder %s225, %s226
      %p235 = scmp.eq.s32.totalorder %s33, 0
      %p236 = por %p234, %p235
      %p237 = scmp.ne.s32.totalorder %s225, %s226
      %p238 = scmp.eq.s32.totalorder %s34, 3
      %p239 = por %p237, %p238
      %p241 = scmp.ne.s32.totalorder %s226, %s240
      %p242 = scmp.eq.s32.totalorder %s34, 0
      %p243 = por %p241, %p242
      %s245 = sadd.s32 %s244, 1
      %p248 = scmp.eq.s32.totalorder %s28, 3
      %p249 = scmp.ne.s32.totalorder %s244, %s246
      %p250 = scmp.eq.s32.totalorder %s28, 0
      %p251 = por %p249, %p250
      %p252 = scmp.ne.s32.totalorder %s244, %s246
      %p253 = scmp.eq.s32.totalorder %s33, 3
      %p254 = por %p252, %p253
      %p255 = scmp.ne.s32.totalorder %s246, %s247
      %p256 = scmp.eq.s32.totalorder %s33, 0
      %p257 = por %p255, %p256
      %p258 = scmp.ne.s32.totalorder %s246, %s247
      %p259 = scmp.eq.s32.totalorder %s34, 3
      %p260 = por %p258, %p259
      %p262 = scmp.ne.s32.totalorder %s247, %s261
      %p263 = scmp.eq.s32.totalorder %s34, 0
      %p264 = por %p262, %p263
      %s266 = sadd.s32 %s265, 1
      %p269 = scmp.eq.s32.totalorder %s28, 3
      %p270 = scmp.ne.s32.totalorder %s265, %s267
      %p271 = scmp.eq.s32.totalorder %s28, 0
      %p272 = por %p270, %p271
      %p273 = scmp.ne.s32.totalorder %s265, %s267
      %p274 = scmp.eq.s32.totalorder %s33, 3
      %p275 = por %p273, %p274
      %p276 = scmp.ne.s32.totalorder %s267, %s268
      %p277 = scmp.eq.s32.totalorder %s33, 0
      %p278 = por %p276, %p277
      %p279 = scmp.ne.s32.totalorder %s267, %s268
      %p280 = scmp.eq.s32.totalorder %s34, 3
      %p281 = por %p279, %p280
      %p283 = scmp.ne.s32.totalorder %s268, %s282
      %p284 = scmp.eq.s32.totalorder %s34, 0
      %p285 = por %p283, %p284
      %s287 = sadd.s32 %s286, 1
      %p290 = scmp.eq.s32.totalorder %s28, 3
      %p291 = scmp.ne.s32.totalorder %s286, %s288
      %p292 = scmp.eq.s32.totalorder %s28, 0
      %p293 = por %p291, %p292
      %p294 = scmp.ne.s32.totalorder %s286, %s288
      %p295 = scmp.eq.s32.totalorder %s33, 3
      %p296 = por %p294, %p295
      %p297 = scmp.ne.s32.totalorder %s288, %s289
      %p298 = scmp.eq.s32.totalorder %s33, 0
      %p299 = por %p297, %p298
      %p300 = scmp.ne.s32.totalorder %s288, %s289
      %p301 = scmp.eq.s32.totalorder %s34, 3
      %p302 = por %p300, %p301
      %p304 = scmp.ne.s32.totalorder %s289, %s303
      %p305 = scmp.eq.s32.totalorder %s34, 0
      %p306 = por %p304, %p305
      %s308 = sadd.s32 %s307, 1
      %p311 = scmp.eq.s32.totalorder %s28, 3
      %p312 = scmp.ne.s32.totalorder %s307, %s309
      %p313 = scmp.eq.s32.totalorder %s28, 0
      %p314 = por %p312, %p313
      %p315 = scmp.ne.s32.totalorder %s307, %s309
      %p316 = scmp.eq.s32.totalorder %s33, 3
      %p317 = por %p315, %p316
      %p318 = scmp.ne.s32.totalorder %s309, %s310
      %p319 = scmp.eq.s32.totalorder %s33, 0
      %p320 = por %p318, %p319
      %p321 = scmp.ne.s32.totalorder %s309, %s310
      %p322 = scmp.eq.s32.totalorder %s34, 3
      %p323 = por %p321, %p322
      %p325 = scmp.ne.s32.totalorder %s310, %s324
      %p326 = scmp.eq.s32.totalorder %s34, 0
      %p327 = por %p325, %p326
      %s329 = sadd.s32 %s328, 1
      %p332 = scmp.eq.s32.totalorder %s28, 3
      %p333 = scmp.ne.s32.totalorder %s328, %s330
      %p334 = scmp.eq.s32.totalorder %s28, 0
      %p335 = por %p333, %p334
      %p336 = scmp.ne.s32.totalorder %s328, %s330
      %p337 = scmp.eq.s32.totalorder %s33, 3
      %p338 = por %p336, %p337
      %p339 = scmp.ne.s32.totalorder %s330, %s331
      %p340 = scmp.eq.s32.totalorder %s33, 0
      %p341 = por %p339, %p340
      %p342 = scmp.ne.s32.totalorder %s330, %s331
      %p343 = scmp.eq.s32.totalorder %s34, 3
      %p344 = por %p342, %p343
      %p346 = scmp.ne.s32.totalorder %s331, %s345
      %p347 = scmp.eq.s32.totalorder %s34, 0
      %p348 = por %p346, %p347
      %s349 = ssub.s32 %s35, %s47
      %s350 = ssub.s32 %s36, %s43
      %s351 = sor.u32 %s349, %s350
      %p352 = scmp.eq.s32.totalorder %s351, 0
      %s354 = sadd.s32 %s353, 1
      %s355 = scalar_select %p352, %s353, %s354
      %p358 = pneg %p352
      %p359 = scmp.eq.s32.totalorder %s28, 3
      %p360 = por %p358, %p359
      %p361 = scmp.ne.s32.totalorder %s353, %s356
      %p362 = scmp.eq.s32.totalorder %s28, 0
      %p363 = por %p361, %p362
      %p364 = scmp.ne.s32.totalorder %s353, %s356
      %p365 = scmp.eq.s32.totalorder %s33, 3
      %p366 = por %p364, %p365
      %p367 = scmp.ne.s32.totalorder %s356, %s357
      %p368 = scmp.eq.s32.totalorder %s33, 0
      %p369 = por %p367, %p368
      %p370 = scmp.ne.s32.totalorder %s356, %s357
      %p371 = scmp.eq.s32.totalorder %s34, 3
      %p372 = por %p370, %p371
      %p374 = scmp.ne.s32.totalorder %s357, %s373
      %p375 = scmp.eq.s32.totalorder %s34, 0
      %p376 = por %p374, %p375
      %p377 = scmp.le.s32.totalorder 1, %s28
      %p378 = scmp.lt.s32.totalorder %s28, 5
      %p379 = pnand %p377, %p378
      %p380 = pneg %p379
      // Predicated region
      $region9: #{tpu_custom_call.1} parent=5 // pred_check
        _
      $region10: #{tpu_custom_call.1} parent=5 // pred_check_branch
        %382 = sbr.rel (%p379) target = $region12
      $region11: #{tpu_custom_call.1} parent=5 // pred_region
        %s383 = ssub.s32 %s28, 1
        // Predicated region
        $region13: #{tpu_custom_call.1} parent=11 // pred_check
          %p384 = pneg %p89
        $region14: #{tpu_custom_call.1} parent=11 // pred_check_branch
          %386 = sbr.rel (%p384) target = $region16
        $region15: #{tpu_custom_call.1} parent=11 // pred_region
          _
        $region16: #{tpu_custom_call.1} parent=11 // pred_fallthru
          _
        // Predicated region
        $region17: #{tpu_custom_call.1} parent=11 // pred_check
          %p387 = pneg %p110
        $region18: #{tpu_custom_call.1} parent=11 // pred_check_branch
          %389 = sbr.rel (%p387) target = $region20
        $region19: #{tpu_custom_call.1} parent=11 // pred_region
          %s391 = ssub.s32 3072, 3072
          %392 = vsyncadd [#allocation8], %s391
          %s393 = sshll.u32 [#allocation7], 4
          %s394 = int_to_ptr.vmem [resolvable:$true] %s393
          %399 = dma.hbm_to_vmem [thread:$0]  %s2, 3072, %s394, [#allocation8], 192, 192, 12
        $region20: #{tpu_custom_call.1} parent=11 // pred_fallthru
          _
        // Predicated region
        $region21: #{tpu_custom_call.1} parent=11 // pred_check
          %p400 = pneg %p131
        $region22: #{tpu_custom_call.1} parent=11 // pred_check_branch
          %402 = sbr.rel (%p400) target = $region24
        $region23: #{tpu_custom_call.1} parent=11 // pred_region
          _
        $region24: #{tpu_custom_call.1} parent=11 // pred_fallthru
          _
        // Predicated region
        $region25: #{tpu_custom_call.1} parent=11 // pred_check
          %p403 = pneg %p152
        $region26: #{tpu_custom_call.1} parent=11 // pred_check_branch
          %405 = sbr.rel (%p403) target = $region28
        $region27: #{tpu_custom_call.1} parent=11 // pred_region
          _
        $region28: #{tpu_custom_call.1} parent=11 // pred_fallthru
          _
        // Predicated region
        $region29: #{tpu_custom_call.1} parent=11 // pred_check
          %p406 = pneg %p173
        $region30: #{tpu_custom_call.1} parent=11 // pred_check_branch
          %408 = sbr.rel (%p406) target = $region32
        $region31: #{tpu_custom_call.1} parent=11 // pred_region
          _
        $region32: #{tpu_custom_call.1} parent=11 // pred_fallthru
          _
        // Predicated region
        $region33: #{tpu_custom_call.1} parent=11 // pred_check
          %p409 = pneg %p194
        $region34: #{tpu_custom_call.1} parent=11 // pred_check_branch
          %411 = sbr.rel (%p409) target = $region36
        $region35: #{tpu_custom_call.1} parent=11 // pred_region
          _
        $region36: #{tpu_custom_call.1} parent=11 // pred_fallthru
          _
        // Predicated region
        $region37: #{tpu_custom_call.1} parent=11 // pred_check
          %p412 = pneg %p215
        $region38: #{tpu_custom_call.1} parent=11 // pred_check_branch
          %414 = sbr.rel (%p412) target = $region40
        $region39: #{tpu_custom_call.1} parent=11 // pred_region
          _
        $region40: #{tpu_custom_call.1} parent=11 // pred_fallthru
          _
        // Predicated region
        $region41: #{tpu_custom_call.1} parent=11 // pred_check
          %p415 = pneg %p236
        $region42: #{tpu_custom_call.1} parent=11 // pred_check_branch
          %417 = sbr.rel (%p415) target = $region44
        $region43: #{tpu_custom_call.1} parent=11 // pred_region
          _
        $region44: #{tpu_custom_call.1} parent=11 // pred_fallthru
          _
        // Predicated region
        $region45: #{tpu_custom_call.1} parent=11 // pred_check
          %p418 = pneg %p257
        $region46: #{tpu_custom_call.1} parent=11 // pred_check_branch
          %420 = sbr.rel (%p418) target = $region48
        $region47: #{tpu_custom_call.1} parent=11 // pred_region
          %s422 = ssub.s32 2048, 2048
          %423 = vsyncadd [#allocation8], %s422
          %s424 = sshll.u32 [#allocation9], 4
          %s425 = int_to_ptr.vmem [resolvable:$true] %s424
          %430 = dma.hbm_to_vmem [thread:$0]  %s9, 2048, %s425, [#allocation8], 64, 64, 4
        $region48: #{tpu_custom_call.1} parent=11 // pred_fallthru
          _
        // Predicated region
        $region49: #{tpu_custom_call.1} parent=11 // pred_check
          %p431 = pneg %p278
        $region50: #{tpu_custom_call.1} parent=11 // pred_check_branch
          %433 = sbr.rel (%p431) target = $region52
        $region51: #{tpu_custom_call.1} parent=11 // pred_region
          _
        $region52: #{tpu_custom_call.1} parent=11 // pred_fallthru
          _
        // Predicated region
        $region53: #{tpu_custom_call.1} parent=11 // pred_check
          %p434 = pneg %p299
        $region54: #{tpu_custom_call.1} parent=11 // pred_check_branch
          %436 = sbr.rel (%p434) target = $region56
        $region55: #{tpu_custom_call.1} parent=11 // pred_region
          _
        $region56: #{tpu_custom_call.1} parent=11 // pred_fallthru
          _
        // Predicated region
        $region57: #{tpu_custom_call.1} parent=11 // pred_check
          %p437 = pneg %p320
        $region58: #{tpu_custom_call.1} parent=11 // pred_check_branch
          %439 = sbr.rel (%p437) target = $region60
        $region59: #{tpu_custom_call.1} parent=11 // pred_region
          %s441 = ssub.s32 1024, 1024
          %442 = vsyncadd [#allocation11], %s441
          %s443 = sshll.u32 [#allocation10], 4
          %s444 = int_to_ptr.vmem [resolvable:$true] %s443
          %449 = dma.hbm_to_vmem [thread:$0]  %s12, 1024, %s444, [#allocation11], 256, 256, 16
        $region60: #{tpu_custom_call.1} parent=11 // pred_fallthru
          _
        // Predicated region
        $region61: #{tpu_custom_call.1} parent=11 // pred_check
          %p450 = pneg %p341
        $region62: #{tpu_custom_call.1} parent=11 // pred_check_branch
          %452 = sbr.rel (%p450) target = $region64
        $region63: #{tpu_custom_call.1} parent=11 // pred_region
          _
        $region64: #{tpu_custom_call.1} parent=11 // pred_fallthru
          _
      $region12: #{tpu_custom_call.1} parent=5 // pred_fallthru
        _
      %p453 = scmp.lt.s32.totalorder %s28, 4
      // Predicated region
      $region65: #{tpu_custom_call.1} parent=5 // pred_check
        %p454 = pneg %p453
      $region66: #{tpu_custom_call.1} parent=5 // pred_check_branch
        %456 = sbr.rel (%p454) target = $region68
      $region67: #{tpu_custom_call.1} parent=5 // pred_region
        // Predicated region
        $region69: #{tpu_custom_call.1} parent=67 // pred_check
          %p457 = pneg %p62
        $region70: #{tpu_custom_call.1} parent=67 // pred_check_branch
          %459 = sbr.rel (%p457) target = $region72
        $region71: #{tpu_custom_call.1} parent=67 // pred_region
          %s460 = sand.u32 %s52, 1
          %s461 = scalar_lea.sflag [#allocation5], %s460
          %s462 = sand.u32 %s52, 1
          %s463 = smul.addr %s462, 8
          %s464 = scalar_lea.vmem [#allocation4], %s463
          %s465 = smul.u32 2, %s36
          %s467 = ssub.s32 128, 128
          %468 = vsyncadd %s461, %s467
          %s469 = smul.addr %s35, 4
          %s470 = sadd.s32 %s465, %s469
          %s471 = smul.addr %s470, 64
          %s472 = scalar_lea.hbm %s0, %s471
          %s473 = sshll.u32 %s464, 4
          %s474 = int_to_ptr.vmem [resolvable:$true] %s473
          %479 = dma.hbm_to_vmem [thread:$0]  %s472, 128, %s474, %s461, 64, 64, 4
        $region72: #{tpu_custom_call.1} parent=67 // pred_fallthru
          _
      $region68: #{tpu_custom_call.1} parent=5 // pred_fallthru
        _
      %p480 = scmp.le.s32.totalorder 1, %s28
      %p481 = scmp.lt.s32.totalorder %s28, 5
      %p482 = pnand %p480, %p481
      %p483 = pneg %p482
      // Predicated region
      $region73: #{tpu_custom_call.1} parent=5 // pred_check
        _
      $region74: #{tpu_custom_call.1} parent=5 // pred_check_branch
        %485 = sbr.rel (%p482) target = $region76
      $region75: #{tpu_custom_call.1} parent=5 // pred_region
        %s486 = ssub.s32 %s28, 1
        %s487 = sand.u32 %s55, 1
        %s488 = scalar_lea.sflag [#allocation5], %s487
        %s489 = sand.u32 %s55, 1
        %s490 = smul.addr %s489, 8
        %s491 = scalar_lea.vmem [#allocation4], %s490
        // Predicated region
        $region77: #{tpu_custom_call.1} parent=75 // pred_check
          %p492 = pneg %p68
        $region78: #{tpu_custom_call.1} parent=75 // pred_check_branch
          %494 = sbr.rel (%p492) target = $region80
        $region79: #{tpu_custom_call.1} parent=75 // pred_region
          %495 = dma.done %s488, 128
        $region80: #{tpu_custom_call.1} parent=75 // pred_fallthru
          _
        // Predicated region
        $region81: #{tpu_custom_call.1} parent=75 // pred_check
          %p496 = pneg %p110
        $region82: #{tpu_custom_call.1} parent=75 // pred_check_branch
          %498 = sbr.rel (%p496) target = $region84
        $region83: #{tpu_custom_call.1} parent=75 // pred_region
          %499 = dma.done [#allocation8], 3072
        $region84: #{tpu_custom_call.1} parent=75 // pred_fallthru
          _
        // Predicated region
        $region85: #{tpu_custom_call.1} parent=75 // pred_check
          %p500 = pneg %p257
        $region86: #{tpu_custom_call.1} parent=75 // pred_check_branch
          %502 = sbr.rel (%p500) target = $region88
        $region87: #{tpu_custom_call.1} parent=75 // pred_region
          %503 = dma.done [#allocation8], 2048
        $region88: #{tpu_custom_call.1} parent=75 // pred_fallthru
          _
        // Predicated region
        $region89: #{tpu_custom_call.1} parent=75 // pred_check
          %p504 = pneg %p320
        $region90: #{tpu_custom_call.1} parent=75 // pred_check_branch
          %506 = sbr.rel (%p504) target = $region92
        $region91: #{tpu_custom_call.1} parent=75 // pred_region
          %507 = dma.done [#allocation11], 1024
        $region92: #{tpu_custom_call.1} parent=75 // pred_fallthru
          _
        %s508 = sand.u32 %s55, 1
        %s509 = scalar_lea.sflag [#allocation5], %s508
        %s510 = sand.u32 %s55, 1
        %s511 = smul.addr %s510, 8
        %s512 = scalar_lea.vmem [#allocation4], %s511
        %p513 = pneg %p68
        %p514 = pneg %p65
        %p515 = pneg %p89
        %p516 = pneg %p86
        %p517 = pneg %p110
        %p518 = pneg %p107
        %p519 = pneg %p131
        %p520 = pneg %p128
        %p521 = pneg %p152
        %p522 = pneg %p149
        %p523 = pneg %p173
        %p524 = pneg %p170
        %p525 = pneg %p194
        %p526 = pneg %p191
        %p527 = pneg %p215
        %p528 = pneg %p212
        %p529 = pneg %p236
        %p530 = pneg %p233
        %p531 = pneg %p257
        %p532 = pneg %p254
        %p533 = pneg %p278
        %p534 = pneg %p275
        %p535 = pneg %p299
        %p536 = pneg %p296
        %p537 = pneg %p320
        %p538 = pneg %p317
        %p539 = pneg %p341
        %p540 = pneg %p338
        %p541 = pneg %p369
        %p542 = pneg %p366
        %s543 = sand.u32 %s356, 1
        %s544 = scalar_lea.sflag [#allocation6], %s543
        %s545 = sand.u32 %s356, 1
        %s546 = smul.addr %s545, 8
        %s547 = scalar_lea.vmem [#allocation12], %s546
        %s548 = smul.u32 2, %s38
        %s549 = smul.u32 2, %s38
        %v551 = vld [vmem:[%s491] sm:$0xf]
        %v552 = vld [vmem:[%s491 + $0x4] sm:$0xf]
        %v553 = vunpack.c.l.bf16 %v551
        %v554 = vunpack.c.l.bf16 %v552
        %v555 = vmul.f32 %v553, %v553
        %v556 = vmul.f32 %v554, %v554
        %557 = vadd.xlane.f32.xlu0 %v555
        %v558 = vpop.xlane.xlu0 %557
        %559 = vadd.xlane.f32.xlu0 %v556
        %v560 = vpop.xlane.xlu0 %559
        %v561 = vrcp.pop 128.0
        %v562 = vmul.f32 %v558, %v561
        %v563 = vmul.f32 %v560, %v561
        %v564 = vadd.f32 %v562, 1e-06
        %v565 = vadd.f32 %v563, 1e-06
        %v566 = vrsqrt.pop %v564
        %v567 = vrsqrt.pop %v565
        %v568 = vmul.f32 %v553, %v566
        %v569 = vmul.f32 %v554, %v567
        %v570 = vld [vmem:[%s1] sm:$0x1]
        %v572 = vlaneseq
        %v573 = vshrl.u32 %v572, 7
        %v574 = vsub.s32 0, %v573
        %v575 = vrot.slane %v570, %v574
        %v577 = vmul.f32 %v568, %v575
        %v578 = vmul.f32 %v569, %v575
        %v579 = vpack.c.bf16 %v578, %v577
        %v580 = vld [vmem:[#allocation7] sm:$0xff]
        %v581 = vld [vmem:[#allocation7 + $0x8] sm:$0xf]
        %v582 = vld [vmem:[#allocation7 + $0xc] sm:$0xff]
        %v583 = vld [vmem:[#allocation7 + $0x14] sm:$0xf]
        %v584 = vld [vmem:[#allocation7 + $0x18] sm:$0xff]
        %v585 = vld [vmem:[#allocation7 + $0x20] sm:$0xf]
        %v586 = vld [vmem:[#allocation7 + $0x24] sm:$0xff]
        %v587 = vld [vmem:[#allocation7 + $0x2c] sm:$0xf]
        %v588 = vld [vmem:[#allocation7 + $0x30] sm:$0xff]
        %v589 = vld [vmem:[#allocation7 + $0x38] sm:$0xf]
        %v590 = vld [vmem:[#allocation7 + $0x3c] sm:$0xff]
        %v591 = vld [vmem:[#allocation7 + $0x44] sm:$0xf]
        %v592 = vld [vmem:[#allocation7 + $0x48] sm:$0xff]
        %v593 = vld [vmem:[#allocation7 + $0x50] sm:$0xf]
        %v594 = vld [vmem:[#allocation7 + $0x54] sm:$0xff]
        %v595 = vld [vmem:[#allocation7 + $0x5c] sm:$0xf]
        %v596 = vld [vmem:[#allocation7 + $0x60] sm:$0xff]
        %v597 = vld [vmem:[#allocation7 + $0x68] sm:$0xf]
        %v598 = vld [vmem:[#allocation7 + $0x6c] sm:$0xff]
        %v599 = vld [vmem:[#allocation7 + $0x74] sm:$0xf]
        %v600 = vld [vmem:[#allocation7 + $0x78] sm:$0xff]
        %v601 = vld [vmem:[#allocation7 + $0x80] sm:$0xf]
        %v602 = vld [vmem:[#allocation7 + $0x84] sm:$0xff]
        %v603 = vld [vmem:[#allocation7 + $0x8c] sm:$0xf]
        %v604 = vld [vmem:[#allocation7 + $0x90] sm:$0xff]
        %v605 = vld [vmem:[#allocation7 + $0x98] sm:$0xf]
        %v606 = vld [vmem:[#allocation7 + $0x9c] sm:$0xff]
        %v607 = vld [vmem:[#allocation7 + $0xa4] sm:$0xf]
        %v608 = vld [vmem:[#allocation7 + $0xa8] sm:$0xff]
        %v609 = vld [vmem:[#allocation7 + $0xb0] sm:$0xf]
        %v610 = vld [vmem:[#allocation7 + $0xb4] sm:$0xff]
        %v611 = vld [vmem:[#allocation7 + $0xbc] sm:$0xf]
        %v644 = vunpack.c.l.b16 %v580
        %v645 = vunpack.c.h.b16 %v580
        %v646 = vunpack.c.l.b16 %v581
        %v647 = vunpack.c.l.b16 %v582
        %v648 = vunpack.c.h.b16 %v582
        %v649 = vunpack.c.l.b16 %v583
        %v650 = vunpack.c.l.b16 %v584
        %v651 = vunpack.c.h.b16 %v584
        %v652 = vunpack.c.l.b16 %v585
        %v653 = vunpack.c.l.b16 %v586
        %v654 = vunpack.c.h.b16 %v586
        %v655 = vunpack.c.l.b16 %v587
        %v656 = vunpack.c.l.b16 %v588
        %v657 = vunpack.c.h.b16 %v588
        %v658 = vunpack.c.l.b16 %v589
        %v659 = vunpack.c.l.b16 %v590
        %v660 = vunpack.c.h.b16 %v590
        %v661 = vunpack.c.l.b16 %v591
        %v662 = vunpack.c.l.b16 %v592
        %v663 = vunpack.c.h.b16 %v592
        %v664 = vunpack.c.l.b16 %v593
        %v665 = vunpack.c.l.b16 %v594
        %v666 = vunpack.c.h.b16 %v594
        %v667 = vunpack.c.l.b16 %v595
        %v668 = vunpack.c.l.b16 %v596
        %v669 = vunpack.c.h.b16 %v596
        %v670 = vunpack.c.l.b16 %v597
        %v671 = vunpack.c.l.b16 %v598
        %v672 = vunpack.c.h.b16 %v598
        %v673 = vunpack.c.l.b16 %v599
        %v674 = vunpack.c.l.b16 %v600
        %v675 = vunpack.c.h.b16 %v600
        %v676 = vunpack.c.l.b16 %v601
        %v677 = vunpack.c.l.b16 %v602
        %v678 = vunpack.c.h.b16 %v602
        %v679 = vunpack.c.l.b16 %v603
        %v680 = vunpack.c.l.b16 %v604
        %v681 = vunpack.c.h.b16 %v604
        %v682 = vunpack.c.l.b16 %v605
        %v683 = vunpack.c.l.b16 %v606
        %v684 = vunpack.c.h.b16 %v606
        %v685 = vunpack.c.l.b16 %v607
        %v686 = vunpack.c.l.b16 %v608
        %v687 = vunpack.c.h.b16 %v608
        %v688 = vunpack.c.l.b16 %v609
        %v689 = vunpack.c.l.b16 %v610
        %v690 = vunpack.c.h.b16 %v610
        %v691 = vunpack.c.l.b16 %v611
        %v692 = vpack.c.b16 %v647, %v644
        %v693 = vpack.c.b16 %v648, %v645
        %v694 = vpack.c.b16 %v649, %v646
        %v695 = vpack.c.b16 %v653, %v650
        %v696 = vpack.c.b16 %v654, %v651
        %v697 = vpack.c.b16 %v655, %v652
        %v698 = vpack.c.b16 %v659, %v656
        %v699 = vpack.c.b16 %v660, %v657
        %v700 = vpack.c.b16 %v661, %v658
        %v701 = vpack.c.b16 %v665, %v662
        %v702 = vpack.c.b16 %v666, %v663
        %v703 = vpack.c.b16 %v667, %v664
        %v704 = vpack.c.b16 %v671, %v668
        %v705 = vpack.c.b16 %v672, %v669
        %v706 = vpack.c.b16 %v673, %v670
        %v707 = vpack.c.b16 %v677, %v674
        %v708 = vpack.c.b16 %v678, %v675
        %v709 = vpack.c.b16 %v679, %v676
        %v710 = vpack.c.b16 %v683, %v680
        %v711 = vpack.c.b16 %v684, %v681
        %v712 = vpack.c.b16 %v685, %v682
        %v713 = vpack.c.b16 %v689, %v686
        %v714 = vpack.c.b16 %v690, %v687
        %v715 = vpack.c.b16 %v691, %v688
        %740 = vmatprep.subr.bf16.mxu0 %v693
        %741 = vmatpush1.bf16.msra.mxu0 %v692
        %742 = vmatprep.subr.bf16.mxu0 %v696
        %743 = vmatpush1.bf16.msra.mxu0 %v695
        %744 = vmatprep.subr.bf16.mxu0 %v699
        %745 = vmatpush1.bf16.msra.mxu0 %v698
        %746 = vmatprep.subr.bf16.mxu0 %v702
        %747 = vmatpush1.bf16.msra.mxu0 %v701
        %748 = vmatprep.subr.bf16.mxu0 %v705
        %749 = vmatpush1.bf16.msra.mxu0 %v704
        %750 = vmatprep.subr.bf16.mxu0 %v708
        %751 = vmatpush1.bf16.msra.mxu0 %v707
        %752 = vmatprep.subr.bf16.mxu0 %v711
        %753 = vmatpush1.bf16.msra.mxu0 %v710
        %754 = vmatprep.subr.bf16.mxu0 %v714
        %755 = vmatpush1.bf16.msra.mxu0 %v713
        %756 = vmatprep.subr.bf16.mxu0 0
        %757 = vmatpush1.bf16.msra.mxu0 0
        %758 = vmatprep.subr.bf16.mxu0 0
        %759 = vmatpush1.bf16.msra.mxu0 0
        %760 = vmatprep.subr.bf16.mxu0 0
        %761 = vmatpush1.bf16.msra.mxu0 0
        %762 = vmatprep.subr.bf16.mxu0 0
        %763 = vmatpush1.bf16.msra.mxu0 0
        %764 = vmatprep.subr.bf16.mxu0 0
        %765 = vmatpush1.bf16.msra.mxu0 0
        %766 = vmatprep.subr.bf16.mxu0 0
        %767 = vmatpush1.bf16.msra.mxu0 0
        %768 = vmatprep.subr.bf16.mxu0 0
        %769 = vmatpush1.bf16.msra.mxu0 0
        %770 = vmatprep.subr.bf16.mxu0 0
        %771 = vmatpush1.bf16.msra.mxu0 0
        %772 = vmatprep.mubr.bf16.mxu0 0
        %773 = vmatmul.mubr.bf16.gmra.mrb[0].mxu0 %v579
        %v774 = vpop.f32.mrb[0].mxu0
        %v775 = vadd.f32 0.0, %v774
        %v776 = vpop.f32.mrb[0].mxu0
        %v777 = vadd.f32 0.0, %v776
        %v778 = vpop.f32.mrb[0].mxu0
        %v779 = vadd.f32 0.0, %v778
        %v780 = vpop.f32.mrb[0].mxu0
        %v781 = vadd.f32 0.0, %v780
        %782 = vdwg.mxu0
        %783 = vmatprep.subr.bf16.mxu0 0
        %784 = vmatpush1.bf16.msra.mxu0 %v694
        %785 = vmatprep.subr.bf16.mxu0 0
        %786 = vmatpush1.bf16.msra.mxu0 %v697
        %787 = vmatprep.subr.bf16.mxu0 0
        %788 = vmatpush1.bf16.msra.mxu0 %v700
        %789 = vmatprep.subr.bf16.mxu0 0
        %790 = vmatpush1.bf16.msra.mxu0 %v703
        %791 = vmatprep.subr.bf16.mxu0 0
        %792 = vmatpush1.bf16.msra.mxu0 %v706
        %793 = vmatprep.subr.bf16.mxu0 0
        %794 = vmatpush1.bf16.msra.mxu0 %v709
        %795 = vmatprep.subr.bf16.mxu0 0
        %796 = vmatpush1.bf16.msra.mxu0 %v712
        %797 = vmatprep.subr.bf16.mxu0 0
        %798 = vmatpush1.bf16.msra.mxu0 %v715
        %799 = vmatprep.subr.bf16.mxu0 0
        %800 = vmatpush1.bf16.msra.mxu0 0
        %801 = vmatprep.subr.bf16.mxu0 0
        %802 = vmatpush1.bf16.msra.mxu0 0
        %803 = vmatprep.subr.bf16.mxu0 0
        %804 = vmatpush1.bf16.msra.mxu0 0
        %805 = vmatprep.subr.bf16.mxu0 0
        %806 = vmatpush1.bf16.msra.mxu0 0
        %807 = vmatprep.subr.bf16.mxu0 0
        %808 = vmatpush1.bf16.msra.mxu0 0
        %809 = vmatprep.subr.bf16.mxu0 0
        %810 = vmatpush1.bf16.msra.mxu0 0
        %811 = vmatprep.subr.bf16.mxu0 0
        %812 = vmatpush1.bf16.msra.mxu0 0
        %813 = vmatprep.subr.bf16.mxu0 0
        %814 = vmatpush1.bf16.msra.mxu0 0
        %815 = vmatprep.mubr.bf16.mxu0 0
        %816 = vmatmul.mubr.bf16.gmra.mrb[0].mxu0 %v579
        %v817 = vpop.f32.mrb[0].mxu0
        %v818 = vadd.f32 0.0, %v817
        %v819 = vpop.f32.mrb[0].mxu0
        %v820 = vpop.f32.mrb[0].mxu0
        %v821 = vadd.f32 0.0, %v820
        %v822 = vpop.f32.mrb[0].mxu0
        %823 = vdwg.mxu0
        %p824 = scmp.eq.s32.totalorder %s38, 0
        // Predicated region
        $region93: #{tpu_custom_call.1} parent=75 // pred_check
          %p825 = pneg %p824
        $region94: #{tpu_custom_call.1} parent=75 // pred_check_branch
          %827 = sbr.rel (%p825) target = $region96
        $region95: #{tpu_custom_call.1} parent=75 // pred_region
          %v828 = vld [vmem:[%s4] sm:$0x7]
          %829 = vst [vmem:[#allocation2] sm:$0x7] %v828
          %v830 = vld [vmem:[%s5] sm:$0x7]
          %831 = vst [vmem:[#allocation3] sm:$0x7] %v830
        $region96: #{tpu_custom_call.1} parent=75 // pred_fallthru
          _
        %v832 = vld [vmem:[#allocation2] sm:$0x7]
        %vm835 = vcmask 1042432
        %v836 = vrot.slane %v777, 5
        %v837 = vrot.slane %v781, 5
        %v838 = vsel %vm835, %v836, %v837
        %v841 = vsel %vm835, %v832, %v836
        %v842 = vld [vmem:[#allocation3] sm:$0x7]
        %v845 = vrot.slane %v818, 5
        %v846 = vrot.slane %v821, 5
        %v847 = vsel %vm835, %v845, %v846
        %v850 = vsel %vm835, %v842, %v845
        %851 = vst [vmem:[#allocation2 - $0x5] sm:$0xe0] %v781
        %852 = vst [vmem:[#allocation3 - $0x5] sm:$0xe0] %v821
        %vm854 = vcmask 1046528
        %v855 = vrot.slane %v841, 1
        %v856 = vrot.slane %v838, 1
        %v857 = vsel %vm854, %v855, %v856
        %v858 = vrot.slane %v837, 1
        %v859 = vsel %vm854, %v856, %v858
        %vm862 = vcmask 1045504
        %v863 = vrot.slane %v841, 2
        %v864 = vrot.slane %v838, 2
        %v865 = vsel %vm862, %v863, %v864
        %v866 = vrot.slane %v837, 2
        %v867 = vsel %vm862, %v864, %v866
        %vm870 = vcmask 1044480
        %v871 = vrot.slane %v841, 3
        %v872 = vrot.slane %v838, 3
        %v873 = vsel %vm870, %v871, %v872
        %v874 = vrot.slane %v837, 3
        %v875 = vsel %vm870, %v872, %v874
        %v878 = vmul.f32 %v775, %v841
        %v879 = vmul.f32 %v775, %v857
        %v880 = vmul.f32 %v775, %v865
        %v881 = vmul.f32 %v775, %v873
        %v882 = vmul.f32 %v779, %v838
        %v883 = vmul.f32 %v779, %v859
        %v884 = vmul.f32 %v779, %v867
        %v885 = vmul.f32 %v779, %v875
        %v886 = vpack.c.bf16 %v882, %v878
        %v887 = vpack.c.bf16 %v883, %v879
        %v888 = vpack.c.bf16 %v884, %v880
        %v889 = vpack.c.bf16 %v885, %v881
        %v890 = vld [vmem:[%s11] sm:$0xf]
        %v891 = vld [vmem:[%s11 + $0x4] sm:$0xf]
        %v892 = vld [vmem:[%s11 + $0x8] sm:$0xf]
        %v893 = vld [vmem:[%s11 + $0xc] sm:$0xf]
        %v894 = vld [vmem:[%s11 + $0x10] sm:$0xf]
        %v895 = vld [vmem:[%s11 + $0x14] sm:$0xf]
        %v896 = vld [vmem:[%s11 + $0x18] sm:$0xf]
        %v897 = vld [vmem:[%s11 + $0x1c] sm:$0xf]
        %v898 = vld [vmem:[%s11 + $0x20] sm:$0xf]
        %v899 = vld [vmem:[%s11 + $0x24] sm:$0xf]
        %v900 = vld [vmem:[%s11 + $0x28] sm:$0xf]
        %v901 = vld [vmem:[%s11 + $0x2c] sm:$0xf]
        %v902 = vld [vmem:[%s11 + $0x30] sm:$0xf]
        %v903 = vld [vmem:[%s11 + $0x34] sm:$0xf]
        %v904 = vld [vmem:[%s11 + $0x38] sm:$0xf]
        %v905 = vld [vmem:[%s11 + $0x3c] sm:$0xf]
        %v906 = vld [vmem:[%s11 + $0x40] sm:$0xf]
        %v907 = vld [vmem:[%s11 + $0x44] sm:$0xf]
        %v908 = vld [vmem:[%s11 + $0x48] sm:$0xf]
        %v909 = vld [vmem:[%s11 + $0x4c] sm:$0xf]
        %v910 = vld [vmem:[%s11 + $0x50] sm:$0xf]
        %v911 = vld [vmem:[%s11 + $0x54] sm:$0xf]
        %v912 = vld [vmem:[%s11 + $0x58] sm:$0xf]
        %v913 = vld [vmem:[%s11 + $0x5c] sm:$0xf]
        %v914 = vld [vmem:[%s11 + $0x60] sm:$0xf]
        %v915 = vld [vmem:[%s11 + $0x64] sm:$0xf]
        %v916 = vld [vmem:[%s11 + $0x68] sm:$0xf]
        %v917 = vld [vmem:[%s11 + $0x6c] sm:$0xf]
        %v918 = vld [vmem:[%s11 + $0x70] sm:$0xf]
        %v919 = vld [vmem:[%s11 + $0x74] sm:$0xf]
        %v920 = vld [vmem:[%s11 + $0x78] sm:$0xf]
        %v921 = vld [vmem:[%s11 + $0x7c] sm:$0xf]
        %v922 = vld [vmem:[%s11 + $0x80] sm:$0xf]
        %v923 = vld [vmem:[%s11 + $0x84] sm:$0xf]
        %v924 = vld [vmem:[%s11 + $0x88] sm:$0xf]
        %v925 = vld [vmem:[%s11 + $0x8c] sm:$0xf]
        %v926 = vld [vmem:[%s11 + $0x90] sm:$0xf]
        %v927 = vld [vmem:[%s11 + $0x94] sm:$0xf]
        %v928 = vld [vmem:[%s11 + $0x98] sm:$0xf]
        %v929 = vld [vmem:[%s11 + $0x9c] sm:$0xf]
        %v930 = vld [vmem:[%s11 + $0xa0] sm:$0xf]
        %v931 = vld [vmem:[%s11 + $0xa4] sm:$0xf]
        %v932 = vld [vmem:[%s11 + $0xa8] sm:$0xf]
        %v933 = vld [vmem:[%s11 + $0xac] sm:$0xf]
        %v934 = vld [vmem:[%s11 + $0xb0] sm:$0xf]
        %v935 = vld [vmem:[%s11 + $0xb4] sm:$0xf]
        %v936 = vld [vmem:[%s11 + $0xb8] sm:$0xf]
        %v937 = vld [vmem:[%s11 + $0xbc] sm:$0xf]
        %v938 = vld [vmem:[%s11 + $0xc0] sm:$0xf]
        %v939 = vld [vmem:[%s11 + $0xc4] sm:$0xf]
        %v940 = vld [vmem:[%s11 + $0xc8] sm:$0xf]
        %v941 = vld [vmem:[%s11 + $0xcc] sm:$0xf]
        %v942 = vld [vmem:[%s11 + $0xd0] sm:$0xf]
        %v943 = vld [vmem:[%s11 + $0xd4] sm:$0xf]
        %v944 = vld [vmem:[%s11 + $0xd8] sm:$0xf]
        %v945 = vld [vmem:[%s11 + $0xdc] sm:$0xf]
        %v946 = vld [vmem:[%s11 + $0xe0] sm:$0xf]
        %v947 = vld [vmem:[%s11 + $0xe4] sm:$0xf]
        %v948 = vld [vmem:[%s11 + $0xe8] sm:$0xf]
        %v949 = vld [vmem:[%s11 + $0xec] sm:$0xf]
        %v950 = vld [vmem:[%s11 + $0xf0] sm:$0xf]
        %v951 = vld [vmem:[%s11 + $0xf4] sm:$0xf]
        %v952 = vld [vmem:[%s11 + $0xf8] sm:$0xf]
        %v953 = vld [vmem:[%s11 + $0xfc] sm:$0xf]
        %v1018 = vunpack.c.l.b16 %v890
        %v1019 = vunpack.c.l.b16 %v891
        %v1020 = vunpack.c.l.b16 %v892
        %v1021 = vunpack.c.l.b16 %v893
        %v1022 = vunpack.c.l.b16 %v894
        %v1023 = vunpack.c.l.b16 %v895
        %v1024 = vunpack.c.l.b16 %v896
        %v1025 = vunpack.c.l.b16 %v897
        %v1026 = vunpack.c.l.b16 %v898
        %v1027 = vunpack.c.l.b16 %v899
        %v1028 = vunpack.c.l.b16 %v900
        %v1029 = vunpack.c.l.b16 %v901
        %v1030 = vunpack.c.l.b16 %v902
        %v1031 = vunpack.c.l.b16 %v903
        %v1032 = vunpack.c.l.b16 %v904
        %v1033 = vunpack.c.l.b16 %v905
        %v1034 = vunpack.c.l.b16 %v906
        %v1035 = vunpack.c.l.b16 %v907
        %v1036 = vunpack.c.l.b16 %v908
        %v1037 = vunpack.c.l.b16 %v909
        %v1038 = vunpack.c.l.b16 %v910
        %v1039 = vunpack.c.l.b16 %v911
        %v1040 = vunpack.c.l.b16 %v912
        %v1041 = vunpack.c.l.b16 %v913
        %v1042 = vunpack.c.l.b16 %v914
        %v1043 = vunpack.c.l.b16 %v915
        %v1044 = vunpack.c.l.b16 %v916
        %v1045 = vunpack.c.l.b16 %v917
        %v1046 = vunpack.c.l.b16 %v918
        %v1047 = vunpack.c.l.b16 %v919
        %v1048 = vunpack.c.l.b16 %v920
        %v1049 = vunpack.c.l.b16 %v921
        %v1050 = vunpack.c.l.b16 %v922
        %v1051 = vunpack.c.l.b16 %v923
        %v1052 = vunpack.c.l.b16 %v924
        %v1053 = vunpack.c.l.b16 %v925
        %v1054 = vunpack.c.l.b16 %v926
        %v1055 = vunpack.c.l.b16 %v927
        %v1056 = vunpack.c.l.b16 %v928
        %v1057 = vunpack.c.l.b16 %v929
        %v1058 = vunpack.c.l.b16 %v930
        %v1059 = vunpack.c.l.b16 %v931
        %v1060 = vunpack.c.l.b16 %v932
        %v1061 = vunpack.c.l.b16 %v933
        %v1062 = vunpack.c.l.b16 %v934
        %v1063 = vunpack.c.l.b16 %v935
        %v1064 = vunpack.c.l.b16 %v936
        %v1065 = vunpack.c.l.b16 %v937
        %v1066 = vunpack.c.l.b16 %v938
        %v1067 = vunpack.c.l.b16 %v939
        %v1068 = vunpack.c.l.b16 %v940
        %v1069 = vunpack.c.l.b16 %v941
        %v1070 = vunpack.c.l.b16 %v942
        %v1071 = vunpack.c.l.b16 %v943
        %v1072 = vunpack.c.l.b16 %v944
        %v1073 = vunpack.c.l.b16 %v945
        %v1074 = vunpack.c.l.b16 %v946
        %v1075 = vunpack.c.l.b16 %v947
        %v1076 = vunpack.c.l.b16 %v948
        %v1077 = vunpack.c.l.b16 %v949
        %v1078 = vunpack.c.l.b16 %v950
        %v1079 = vunpack.c.l.b16 %v951
        %v1080 = vunpack.c.l.b16 %v952
        %v1081 = vunpack.c.l.b16 %v953
        %v1082 = vpack.c.b16 %v1019, %v1018
        %v1083 = vpack.c.b16 %v1021, %v1020
        %v1084 = vpack.c.b16 %v1023, %v1022
        %v1085 = vpack.c.b16 %v1025, %v1024
        %v1086 = vpack.c.b16 %v1027, %v1026
        %v1087 = vpack.c.b16 %v1029, %v1028
        %v1088 = vpack.c.b16 %v1031, %v1030
        %v1089 = vpack.c.b16 %v1033, %v1032
        %v1090 = vpack.c.b16 %v1035, %v1034
        %v1091 = vpack.c.b16 %v1037, %v1036
        %v1092 = vpack.c.b16 %v1039, %v1038
        %v1093 = vpack.c.b16 %v1041, %v1040
        %v1094 = vpack.c.b16 %v1043, %v1042
        %v1095 = vpack.c.b16 %v1045, %v1044
        %v1096 = vpack.c.b16 %v1047, %v1046
        %v1097 = vpack.c.b16 %v1049, %v1048
        %v1098 = vpack.c.b16 %v1051, %v1050
        %v1099 = vpack.c.b16 %v1053, %v1052
        %v1100 = vpack.c.b16 %v1055, %v1054
        %v1101 = vpack.c.b16 %v1057, %v1056
        %v1102 = vpack.c.b16 %v1059, %v1058
        %v1103 = vpack.c.b16 %v1061, %v1060
        %v1104 = vpack.c.b16 %v1063, %v1062
        %v1105 = vpack.c.b16 %v1065, %v1064
        %v1106 = vpack.c.b16 %v1067, %v1066
        %v1107 = vpack.c.b16 %v1069, %v1068
        %v1108 = vpack.c.b16 %v1071, %v1070
        %v1109 = vpack.c.b16 %v1073, %v1072
        %v1110 = vpack.c.b16 %v1075, %v1074
        %v1111 = vpack.c.b16 %v1077, %v1076
        %v1112 = vpack.c.b16 %v1079, %v1078
        %v1113 = vpack.c.b16 %v1081, %v1080
        %1146 = vmatprep.subr.bf16.mxu0 0
        %1147 = vmatpush1.bf16.msra.mxu0 %v1082
        %1148 = vmatprep.subr.bf16.mxu0 0
        %1149 = vmatpush1.bf16.msra.mxu0 %v1083
        %1150 = vmatprep.subr.bf16.mxu0 0
        %1151 = vmatpush1.bf16.msra.mxu0 %v1084
        %1152 = vmatprep.subr.bf16.mxu0 0
        %1153 = vmatpush1.bf16.msra.mxu0 %v1085
        %1154 = vmatprep.subr.bf16.mxu0 0
        %1155 = vmatpush1.bf16.msra.mxu0 %v1086
        %1156 = vmatprep.subr.bf16.mxu0 0
        %1157 = vmatpush1.bf16.msra.mxu0 %v1087
        %1158 = vmatprep.subr.bf16.mxu0 0
        %1159 = vmatpush1.bf16.msra.mxu0 %v1088
        %1160 = vmatprep.subr.bf16.mxu0 0
        %1161 = vmatpush1.bf16.msra.mxu0 %v1089
        %1162 = vmatprep.subr.bf16.mxu0 0
        %1163 = vmatpush1.bf16.msra.mxu0 %v1090
        %1164 = vmatprep.subr.bf16.mxu0 0
        %1165 = vmatpush1.bf16.msra.mxu0 %v1091
        %1166 = vmatprep.subr.bf16.mxu0 0
        %1167 = vmatpush1.bf16.msra.mxu0 %v1092
        %1168 = vmatprep.subr.bf16.mxu0 0
        %1169 = vmatpush1.bf16.msra.mxu0 %v1093
        %1170 = vmatprep.subr.bf16.mxu0 0
        %1171 = vmatpush1.bf16.msra.mxu0 %v1094
        %1172 = vmatprep.subr.bf16.mxu0 0
        %1173 = vmatpush1.bf16.msra.mxu0 %v1095
        %1174 = vmatprep.subr.bf16.mxu0 0
        %1175 = vmatpush1.bf16.msra.mxu0 %v1096
        %1176 = vmatprep.subr.bf16.mxu0 0
        %1177 = vmatpush1.bf16.msra.mxu0 %v1097
        %1178 = vmatprep.mubr.bf16.mxu0 %v887
        %1179 = vmatmul.mubr.bf16.gmra.mrb[0].mxu0 %v886
        %v1180 = vpop.f32.mrb[0].mxu0
        %v1181 = vadd.f32 0.0, %v1180
        %v1182 = vpop.f32.mrb[0].mxu0
        %v1183 = vpop.f32.mrb[0].mxu0
        %v1184 = vadd.f32 0.0, %v1183
        %v1185 = vpop.f32.mrb[0].mxu0
        %1186 = vdwg.mxu0
        %1187 = vmatprep.subr.bf16.mxu0 0
        %1188 = vmatpush1.bf16.msra.mxu0 %v1098
        %1189 = vmatprep.subr.bf16.mxu0 0
        %1190 = vmatpush1.bf16.msra.mxu0 %v1099
        %1191 = vmatprep.subr.bf16.mxu0 0
        %1192 = vmatpush1.bf16.msra.mxu0 %v1100
        %1193 = vmatprep.subr.bf16.mxu0 0
        %1194 = vmatpush1.bf16.msra.mxu0 %v1101
        %1195 = vmatprep.subr.bf16.mxu0 0
        %1196 = vmatpush1.bf16.msra.mxu0 %v1102
        %1197 = vmatprep.subr.bf16.mxu0 0
        %1198 = vmatpush1.bf16.msra.mxu0 %v1103
        %1199 = vmatprep.subr.bf16.mxu0 0
        %1200 = vmatpush1.bf16.msra.mxu0 %v1104
        %1201 = vmatprep.subr.bf16.mxu0 0
        %1202 = vmatpush1.bf16.msra.mxu0 %v1105
        %1203 = vmatprep.subr.bf16.mxu0 0
        %1204 = vmatpush1.bf16.msra.mxu0 %v1106
        %1205 = vmatprep.subr.bf16.mxu0 0
        %1206 = vmatpush1.bf16.msra.mxu0 %v1107
        %1207 = vmatprep.subr.bf16.mxu0 0
        %1208 = vmatpush1.bf16.msra.mxu0 %v1108
        %1209 = vmatprep.subr.bf16.mxu0 0
        %1210 = vmatpush1.bf16.msra.mxu0 %v1109
        %1211 = vmatprep.subr.bf16.mxu0 0
        %1212 = vmatpush1.bf16.msra.mxu0 %v1110
        %1213 = vmatprep.subr.bf16.mxu0 0
        %1214 = vmatpush1.bf16.msra.mxu0 %v1111
        %1215 = vmatprep.subr.bf16.mxu0 0
        %1216 = vmatpush1.bf16.msra.mxu0 %v1112
        %1217 = vmatprep.subr.bf16.mxu0 0
        %1218 = vmatpush1.bf16.msra.mxu0 %v1113
        %1219 = vmatprep.mubr.bf16.mxu0 %v889
        %1220 = vmatmul.mubr.bf16.gmra.mrb[0].mxu0 %v888
        %v1221 = vpop.f32.mrb[0].mxu0
        %v1222 = vadd.f32 %v1181, %v1221
        %v1223 = vpop.f32.mrb[0].mxu0
        %v1224 = vpop.f32.mrb[0].mxu0
        %v1225 = vadd.f32 %v1184, %v1224
        %v1226 = vpop.f32.mrb[0].mxu0
        %1227 = vdwg.mxu0
        %1230 = vrot.lane.b32.xlu0 %v1222, 120
        %v1231 = vpop.permute.xlu0 %1230
        %1232 = vrot.lane.b32.xlu0 %v1225, 120
        %v1233 = vpop.permute.xlu0 %1232
        %v1236 = vmax.f32 %v1222, %v1231
        %v1237 = vmax.f32 %v1225, %v1233
        %1238 = vrot.lane.b32.xlu0 %v1222, 112
        %v1239 = vpop.permute.xlu0 %1238
        %1240 = vrot.lane.b32.xlu0 %v1225, 112
        %v1241 = vpop.permute.xlu0 %1240
        %v1244 = vmax.f32 %v1236, %v1239
        %v1245 = vmax.f32 %v1237, %v1241
        %1246 = vrot.lane.b32.xlu0 %v1222, 104
        %v1247 = vpop.permute.xlu0 %1246
        %1248 = vrot.lane.b32.xlu0 %v1225, 104
        %v1249 = vpop.permute.xlu0 %1248
        %v1252 = vmax.f32 %v1244, %v1247
        %v1253 = vmax.f32 %v1245, %v1249
        %1256 = vrot.lane.b32.xlu0 %v1252, 8
        %v1257 = vpop.permute.xlu0 %1256
        %1258 = vrot.lane.b32.xlu0 %v1253, 8
        %v1259 = vpop.permute.xlu0 %1258
        %1262 = vrot.lane.b32.xlu0 %v1252, 16
        %v1263 = vpop.permute.xlu0 %1262
        %1264 = vrot.lane.b32.xlu0 %v1253, 16
        %v1265 = vpop.permute.xlu0 %1264
        %1268 = vrot.lane.b32.xlu0 %v1252, 24
        %v1269 = vpop.permute.xlu0 %1268
        %1270 = vrot.lane.b32.xlu0 %v1253, 24
        %v1271 = vpop.permute.xlu0 %1270
        %vm1274 = vcmask 64512
        %v1275 = vsel %vm1274, %v1252, %v1257
        %v1276 = vsel %vm1274, %v1253, %v1259
        %vm1277 = vcmask 130048
        %v1278 = vsel %vm1277, %v1275, %v1263
        %v1279 = vsel %vm1277, %v1276, %v1265
        %vm1280 = vcmask 195584
        %v1281 = vsel %vm1280, %v1278, %v1269
        %v1282 = vsel %vm1280, %v1279, %v1271
        %v1283 = vsub.f32 %v1222, %v1281
        %v1284 = vsub.f32 %v1225, %v1282
        %v1285 = vmul.f32 %v1283, 1.442695
        %v1286 = vpow.pop %v1285
        %v1287 = vmul.f32 %v1284, 1.442695
        %v1288 = vpow.pop %v1287
        %1291 = vrot.lane.b32.xlu0 %v1286, 120
        %v1292 = vpop.permute.xlu0 %1291
        %1293 = vrot.lane.b32.xlu0 %v1288, 120
        %v1294 = vpop.permute.xlu0 %1293
        %v1297 = vadd.f32 %v1286, %v1292
        %v1298 = vadd.f32 %v1288, %v1294
        %1299 = vrot.lane.b32.xlu0 %v1286, 112
        %v1300 = vpop.permute.xlu0 %1299
        %1301 = vrot.lane.b32.xlu0 %v1288, 112
        %v1302 = vpop.permute.xlu0 %1301
        %v1305 = vadd.f32 %v1297, %v1300
        %v1306 = vadd.f32 %v1298, %v1302
        %1307 = vrot.lane.b32.xlu0 %v1286, 104
        %v1308 = vpop.permute.xlu0 %1307
        %1309 = vrot.lane.b32.xlu0 %v1288, 104
        %v1310 = vpop.permute.xlu0 %1309
        %v1313 = vadd.f32 %v1305, %v1308
        %v1314 = vadd.f32 %v1306, %v1310
        %v1315 = vrcp.pop %v1313
        %v1316 = vrcp.pop %v1314
        %1319 = vrot.lane.b32.xlu0 %v1315, 8
        %v1320 = vpop.permute.xlu0 %1319
        %1321 = vrot.lane.b32.xlu0 %v1316, 8
        %v1322 = vpop.permute.xlu0 %1321
        %1325 = vrot.lane.b32.xlu0 %v1315, 16
        %v1326 = vpop.permute.xlu0 %1325
        %1327 = vrot.lane.b32.xlu0 %v1316, 16
        %v1328 = vpop.permute.xlu0 %1327
        %1331 = vrot.lane.b32.xlu0 %v1315, 24
        %v1332 = vpop.permute.xlu0 %1331
        %1333 = vrot.lane.b32.xlu0 %v1316, 24
        %v1334 = vpop.permute.xlu0 %1333
        %v1337 = vsel %vm1274, %v1315, %v1320
        %v1338 = vsel %vm1274, %v1316, %v1322
        %v1339 = vsel %vm1277, %v1337, %v1326
        %v1340 = vsel %vm1277, %v1338, %v1328
        %v1341 = vsel %vm1280, %v1339, %v1332
        %v1342 = vsel %vm1280, %v1340, %v1334
        %v1343 = vmul.f32 %v1286, %v1341
        %v1344 = vmul.f32 %v1288, %v1342
        %v1345 = vpack.c.bf16 %v1344, %v1343
        %v1346 = vld [vmem:[#allocation10] sm:$0xff]
        %v1347 = vld [vmem:[#allocation10 + $0x8] sm:$0xff]
        %v1348 = vld [vmem:[#allocation10 + $0x10] sm:$0xff]
        %v1349 = vld [vmem:[#allocation10 + $0x18] sm:$0xff]
        %v1350 = vld [vmem:[#allocation10 + $0x20] sm:$0xff]
        %v1351 = vld [vmem:[#allocation10 + $0x28] sm:$0xff]
        %v1352 = vld [vmem:[#allocation10 + $0x30] sm:$0xff]
        %v1353 = vld [vmem:[#allocation10 + $0x38] sm:$0xff]
        %v1362 = vunpack.c.l.b16 %v1346
        %v1363 = vunpack.c.h.b16 %v1346
        %v1364 = vunpack.c.l.b16 %v1347
        %v1365 = vunpack.c.h.b16 %v1347
        %v1366 = vunpack.c.l.b16 %v1348
        %v1367 = vunpack.c.h.b16 %v1348
        %v1368 = vunpack.c.l.b16 %v1349
        %v1369 = vunpack.c.h.b16 %v1349
        %v1370 = vunpack.c.l.b16 %v1350
        %v1371 = vunpack.c.h.b16 %v1350
        %v1372 = vunpack.c.l.b16 %v1351
        %v1373 = vunpack.c.h.b16 %v1351
        %v1374 = vunpack.c.l.b16 %v1352
        %v1375 = vunpack.c.h.b16 %v1352
        %v1376 = vunpack.c.l.b16 %v1353
        %v1377 = vunpack.c.h.b16 %v1353
        %v1378 = vpack.c.b16 %v1366, %v1362
        %v1379 = vpack.c.b16 %v1367, %v1363
        %v1380 = vpack.c.b16 %v1368, %v1364
        %v1381 = vpack.c.b16 %v1369, %v1365
        %v1382 = vpack.c.b16 %v1374, %v1370
        %v1383 = vpack.c.b16 %v1375, %v1371
        %v1384 = vpack.c.b16 %v1376, %v1372
        %v1385 = vpack.c.b16 %v1377, %v1373
        %vm1394 = vcmask 261120
        %v1396 = vsel %vm1394, %v1345, 0
        %1398 = vmatprep.subr.bf16.mxu0 %v1379
        %1399 = vmatpush1.bf16.msra.mxu0 %v1378
        %1400 = vmatprep.subr.bf16.mxu0 %v1383
        %1401 = vmatpush1.bf16.msra.mxu0 %v1382
        %1402 = vmatprep.subr.bf16.mxu0 0
        %1403 = vmatpush1.bf16.msra.mxu0 0
        %1404 = vmatprep.subr.bf16.mxu0 0
        %1405 = vmatpush1.bf16.msra.mxu0 0
        %1406 = vmatprep.subr.bf16.mxu0 0
        %1407 = vmatpush1.bf16.msra.mxu0 0
        %1408 = vmatprep.subr.bf16.mxu0 0
        %1409 = vmatpush1.bf16.msra.mxu0 0
        %1410 = vmatprep.subr.bf16.mxu0 0
        %1411 = vmatpush1.bf16.msra.mxu0 0
        %1412 = vmatprep.subr.bf16.mxu0 0
        %1413 = vmatpush1.bf16.msra.mxu0 0
        %1414 = vmatprep.subr.bf16.mxu0 0
        %1415 = vmatpush1.bf16.msra.mxu0 0
        %1416 = vmatprep.subr.bf16.mxu0 0
        %1417 = vmatpush1.bf16.msra.mxu0 0
        %1418 = vmatprep.subr.bf16.mxu0 0
        %1419 = vmatpush1.bf16.msra.mxu0 0
        %1420 = vmatprep.subr.bf16.mxu0 0
        %1421 = vmatpush1.bf16.msra.mxu0 0
        %1422 = vmatprep.subr.bf16.mxu0 0
        %1423 = vmatpush1.bf16.msra.mxu0 0
        %1424 = vmatprep.subr.bf16.mxu0 0
        %1425 = vmatpush1.bf16.msra.mxu0 0
        %1426 = vmatprep.subr.bf16.mxu0 0
        %1427 = vmatpush1.bf16.msra.mxu0 0
        %1428 = vmatprep.subr.bf16.mxu0 0
        %1429 = vmatpush1.bf16.msra.mxu0 0
        %1430 = vmatprep.mubr.bf16.mxu0 0
        %1431 = vmatmul.mubr.bf16.gmra.mrb[0].mxu0 %v1396
        %v1432 = vpop.f32.mrb[0].mxu0
        %v1433 = vadd.f32 0.0, %v1432
        %v1434 = vpop.f32.mrb[0].mxu0
        %v1435 = vadd.f32 0.0, %v1434
        %v1436 = vpop.f32.mrb[0].mxu0
        %v1437 = vadd.f32 0.0, %v1436
        %v1438 = vpop.f32.mrb[0].mxu0
        %v1439 = vadd.f32 0.0, %v1438
        %1440 = vdwg.mxu0
        %1441 = vmatprep.subr.bf16.mxu0 %v1381
        %1442 = vmatpush1.bf16.msra.mxu0 %v1380
        %1443 = vmatprep.subr.bf16.mxu0 %v1385
        %1444 = vmatpush1.bf16.msra.mxu0 %v1384
        %1445 = vmatprep.subr.bf16.mxu0 0
        %1446 = vmatpush1.bf16.msra.mxu0 0
        %1447 = vmatprep.subr.bf16.mxu0 0
        %1448 = vmatpush1.bf16.msra.mxu0 0
        %1449 = vmatprep.subr.bf16.mxu0 0
        %1450 = vmatpush1.bf16.msra.mxu0 0
        %1451 = vmatprep.subr.bf16.mxu0 0
        %1452 = vmatpush1.bf16.msra.mxu0 0
        %1453 = vmatprep.subr.bf16.mxu0 0
        %1454 = vmatpush1.bf16.msra.mxu0 0
        %1455 = vmatprep.subr.bf16.mxu0 0
        %1456 = vmatpush1.bf16.msra.mxu0 0
        %1457 = vmatprep.subr.bf16.mxu0 0
        %1458 = vmatpush1.bf16.msra.mxu0 0
        %1459 = vmatprep.subr.bf16.mxu0 0
        %1460 = vmatpush1.bf16.msra.mxu0 0
        %1461 = vmatprep.subr.bf16.mxu0 0
        %1462 = vmatpush1.bf16.msra.mxu0 0
        %1463 = vmatprep.subr.bf16.mxu0 0
        %1464 = vmatpush1.bf16.msra.mxu0 0
        %1465 = vmatprep.subr.bf16.mxu0 0
        %1466 = vmatpush1.bf16.msra.mxu0 0
        %1467 = vmatprep.subr.bf16.mxu0 0
        %1468 = vmatpush1.bf16.msra.mxu0 0
        %1469 = vmatprep.subr.bf16.mxu0 0
        %1470 = vmatpush1.bf16.msra.mxu0 0
        %1471 = vmatprep.subr.bf16.mxu0 0
        %1472 = vmatpush1.bf16.msra.mxu0 0
        %1473 = vmatprep.mubr.bf16.mxu0 0
        %1474 = vmatmul.mubr.bf16.gmra.mrb[0].mxu0 %v1396
        %v1475 = vpop.f32.mrb[0].mxu0
        %v1476 = vadd.f32 0.0, %v1475
        %v1477 = vpop.f32.mrb[0].mxu0
        %v1478 = vadd.f32 0.0, %v1477
        %v1479 = vpop.f32.mrb[0].mxu0
        %v1480 = vadd.f32 0.0, %v1479
        %v1481 = vpop.f32.mrb[0].mxu0
        %v1482 = vadd.f32 0.0, %v1481
        %1483 = vdwg.mxu0
        %v1485 = vrot.slane %v850, 1
        %v1486 = vrot.slane %v847, 1
        %v1487 = vsel %vm854, %v1485, %v1486
        %v1488 = vrot.slane %v846, 1
        %v1489 = vsel %vm854, %v1486, %v1488
        %v1492 = vrot.slane %v850, 2
        %v1493 = vrot.slane %v847, 2
        %v1494 = vsel %vm862, %v1492, %v1493
        %v1495 = vrot.slane %v846, 2
        %v1496 = vsel %vm862, %v1493, %v1495
        %v1499 = vrot.slane %v850, 3
        %v1500 = vrot.slane %v847, 3
        %v1501 = vsel %vm870, %v1499, %v1500
        %v1502 = vrot.slane %v846, 3
        %v1503 = vsel %vm870, %v1500, %v1502
        %v1506 = vmul.f32 %v1433, %v850
        %v1507 = vmul.f32 %v1435, %v1487
        %v1508 = vmul.f32 %v1476, %v1494
        %v1509 = vmul.f32 %v1478, %v1501
        %v1510 = vmul.f32 %v1437, %v847
        %v1511 = vmul.f32 %v1439, %v1489
        %v1512 = vmul.f32 %v1480, %v1496
        %v1513 = vmul.f32 %v1482, %v1503
        %v1514 = vadd.f32 %v1506, %v1507
        %v1515 = vadd.f32 %v1510, %v1511
        %v1516 = vadd.f32 %v1514, %v1508
        %v1517 = vadd.f32 %v1515, %v1512
        %v1518 = vadd.f32 %v1516, %v1509
        %v1519 = vadd.f32 %v1517, %v1513
        %v1520 = vpack.c.bf16 %v1519, %v1518
        %v1521 = vld [vmem:[%s3] sm:$0xf]
        %v1522 = vld [vmem:[%s3 + $0x4] sm:$0xf]
        %v1523 = vld [vmem:[%s3 + $0x8] sm:$0xf]
        %v1524 = vld [vmem:[%s3 + $0xc] sm:$0xf]
        %v1525 = vld [vmem:[%s3 + $0x10] sm:$0xf]
        %v1526 = vld [vmem:[%s3 + $0x14] sm:$0xf]
        %v1527 = vld [vmem:[%s3 + $0x18] sm:$0xf]
        %v1528 = vld [vmem:[%s3 + $0x1c] sm:$0xf]
        %v1529 = vld [vmem:[%s3 + $0x20] sm:$0xf]
        %v1530 = vld [vmem:[%s3 + $0x24] sm:$0xf]
        %v1531 = vld [vmem:[%s3 + $0x28] sm:$0xf]
        %v1532 = vld [vmem:[%s3 + $0x2c] sm:$0xf]
        %v1533 = vld [vmem:[%s3 + $0x30] sm:$0xf]
        %v1534 = vld [vmem:[%s3 + $0x34] sm:$0xf]
        %v1535 = vld [vmem:[%s3 + $0x38] sm:$0xf]
        %v1536 = vld [vmem:[%s3 + $0x3c] sm:$0xf]
        %v1553 = vunpack.c.l.b16 %v1521
        %v1554 = vunpack.c.l.b16 %v1522
        %v1555 = vunpack.c.l.b16 %v1523
        %v1556 = vunpack.c.l.b16 %v1524
        %v1557 = vunpack.c.l.b16 %v1525
        %v1558 = vunpack.c.l.b16 %v1526
        %v1559 = vunpack.c.l.b16 %v1527
        %v1560 = vunpack.c.l.b16 %v1528
        %v1561 = vunpack.c.l.b16 %v1529
        %v1562 = vunpack.c.l.b16 %v1530
        %v1563 = vunpack.c.l.b16 %v1531
        %v1564 = vunpack.c.l.b16 %v1532
        %v1565 = vunpack.c.l.b16 %v1533
        %v1566 = vunpack.c.l.b16 %v1534
        %v1567 = vunpack.c.l.b16 %v1535
        %v1568 = vunpack.c.l.b16 %v1536
        %v1569 = vpack.c.b16 %v1554, %v1553
        %v1570 = vpack.c.b16 %v1556, %v1555
        %v1571 = vpack.c.b16 %v1558, %v1557
        %v1572 = vpack.c.b16 %v1560, %v1559
        %v1573 = vpack.c.b16 %v1562, %v1561
        %v1574 = vpack.c.b16 %v1564, %v1563
        %v1575 = vpack.c.b16 %v1566, %v1565
        %v1576 = vpack.c.b16 %v1568, %v1567
        %1585 = vmatprep.subr.bf16.mxu0 0
        %1586 = vmatpush1.bf16.msra.mxu0 %v1569
        %1587 = vmatprep.subr.bf16.mxu0 0
        %1588 = vmatpush1.bf16.msra.mxu0 %v1570
        %1589 = vmatprep.subr.bf16.mxu0 0
        %1590 = vmatpush1.bf16.msra.mxu0 %v1571
        %1591 = vmatprep.subr.bf16.mxu0 0
        %1592 = vmatpush1.bf16.msra.mxu0 %v1572
        %1593 = vmatprep.subr.bf16.mxu0 0
        %1594 = vmatpush1.bf16.msra.mxu0 %v1573
        %1595 = vmatprep.subr.bf16.mxu0 0
        %1596 = vmatpush1.bf16.msra.mxu0 %v1574
        %1597 = vmatprep.subr.bf16.mxu0 0
        %1598 = vmatpush1.bf16.msra.mxu0 %v1575
        %1599 = vmatprep.subr.bf16.mxu0 0
        %1600 = vmatpush1.bf16.msra.mxu0 %v1576
        %1601 = vmatprep.subr.bf16.mxu0 0
        %1602 = vmatpush1.bf16.msra.mxu0 0
        %1603 = vmatprep.subr.bf16.mxu0 0
        %1604 = vmatpush1.bf16.msra.mxu0 0
        %1605 = vmatprep.subr.bf16.mxu0 0
        %1606 = vmatpush1.bf16.msra.mxu0 0
        %1607 = vmatprep.subr.bf16.mxu0 0
        %1608 = vmatpush1.bf16.msra.mxu0 0
        %1609 = vmatprep.subr.bf16.mxu0 0
        %1610 = vmatpush1.bf16.msra.mxu0 0
        %1611 = vmatprep.subr.bf16.mxu0 0
        %1612 = vmatpush1.bf16.msra.mxu0 0
        %1613 = vmatprep.subr.bf16.mxu0 0
        %1614 = vmatpush1.bf16.msra.mxu0 0
        %1615 = vmatprep.subr.bf16.mxu0 0
        %1616 = vmatpush1.bf16.msra.mxu0 0
        %1617 = vmatprep.mubr.bf16.mxu0 0
        %1618 = vmatmul.mubr.bf16.gmra.mrb[0].mxu0 %v1520
        %v1619 = vpop.f32.mrb[0].mxu0
        %v1620 = vadd.f32 0.0, %v1619
        %v1621 = vpop.f32.mrb[0].mxu0
        %v1622 = vpop.f32.mrb[0].mxu0
        %v1623 = vadd.f32 0.0, %v1622
        %v1624 = vpop.f32.mrb[0].mxu0
        %1625 = vdwg.mxu0
        %v1626 = vadd.f32 %v553, %v1620
        %v1627 = vadd.f32 %v554, %v1623
        %v1628 = vmul.f32 %v1626, %v1626
        %v1629 = vmul.f32 %v1627, %v1627
        %1630 = vadd.xlane.f32.xlu0 %v1628
        %v1631 = vpop.xlane.xlu0 %1630
        %1632 = vadd.xlane.f32.xlu0 %v1629
        %v1633 = vpop.xlane.xlu0 %1632
        %v1634 = vmul.f32 %v1631, %v561
        %v1635 = vmul.f32 %v1633, %v561
        %v1636 = vadd.f32 %v1634, 1e-06
        %v1637 = vadd.f32 %v1635, 1e-06
        %v1638 = vrsqrt.pop %v1636
        %v1639 = vrsqrt.pop %v1637
        %v1640 = vmul.f32 %v1626, %v1638
        %v1641 = vmul.f32 %v1627, %v1639
        %v1642 = vld [vmem:[%s6] sm:$0x1]
        %v1644 = vlaneseq
        %v1645 = vshrl.u32 %v1644, 7
        %v1646 = vsub.s32 0, %v1645
        %v1647 = vrot.slane %v1642, %v1646
        %v1649 = vmul.f32 %v1640, %v1647
        %v1650 = vmul.f32 %v1641, %v1647
        %v1651 = vpack.c.bf16 %v1650, %v1649
        %v1652 = vld [vmem:[%s7] sm:$0xff]
        %v1653 = vld [vmem:[%s7 + $0x8] sm:$0xff]
        %v1654 = vld [vmem:[%s7 + $0x10] sm:$0xff]
        %v1655 = vld [vmem:[%s7 + $0x18] sm:$0xff]
        %v1656 = vld [vmem:[%s7 + $0x20] sm:$0xff]
        %v1657 = vld [vmem:[%s7 + $0x28] sm:$0xff]
        %v1658 = vld [vmem:[%s7 + $0x30] sm:$0xff]
        %v1659 = vld [vmem:[%s7 + $0x38] sm:$0xff]
        %v1660 = vld [vmem:[%s7 + $0x40] sm:$0xff]
        %v1661 = vld [vmem:[%s7 + $0x48] sm:$0xff]
        %v1662 = vld [vmem:[%s7 + $0x50] sm:$0xff]
        %v1663 = vld [vmem:[%s7 + $0x58] sm:$0xff]
        %v1664 = vld [vmem:[%s7 + $0x60] sm:$0xff]
        %v1665 = vld [vmem:[%s7 + $0x68] sm:$0xff]
        %v1666 = vld [vmem:[%s7 + $0x70] sm:$0xff]
        %v1667 = vld [vmem:[%s7 + $0x78] sm:$0xff]
        %v1668 = vld [vmem:[%s7 + $0x80] sm:$0xff]
        %v1669 = vld [vmem:[%s7 + $0x88] sm:$0xff]
        %v1670 = vld [vmem:[%s7 + $0x90] sm:$0xff]
        %v1671 = vld [vmem:[%s7 + $0x98] sm:$0xff]
        %v1672 = vld [vmem:[%s7 + $0xa0] sm:$0xff]
        %v1673 = vld [vmem:[%s7 + $0xa8] sm:$0xff]
        %v1674 = vld [vmem:[%s7 + $0xb0] sm:$0xff]
        %v1675 = vld [vmem:[%s7 + $0xb8] sm:$0xff]
        %v1676 = vld [vmem:[%s7 + $0xc0] sm:$0xff]
        %v1677 = vld [vmem:[%s7 + $0xc8] sm:$0xff]
        %v1678 = vld [vmem:[%s7 + $0xd0] sm:$0xff]
        %v1679 = vld [vmem:[%s7 + $0xd8] sm:$0xff]
        %v1680 = vld [vmem:[%s7 + $0xe0] sm:$0xff]
        %v1681 = vld [vmem:[%s7 + $0xe8] sm:$0xff]
        %v1682 = vld [vmem:[%s7 + $0xf0] sm:$0xff]
        %v1683 = vld [vmem:[%s7 + $0xf8] sm:$0xff]
        %v1684 = vld [vmem:[%s8] sm:$0xf]
        %v1686 = vlaneseq
        %v1687 = vshrl.u32 %v1686, 7
        %v1688 = vsub.s32 0, %v1687
        %v1689 = vrot.slane %v1684, %v1688
        %v1690 = vlaneseq
        %v1691 = vshrl.u32 %v1690, 7
        %v1692 = vsub.s32 1, %v1691
        %v1693 = vrot.slane %v1684, %v1692
        %v1694 = vlaneseq
        %v1695 = vshrl.u32 %v1694, 7
        %v1696 = vsub.s32 2, %v1695
        %v1697 = vrot.slane %v1684, %v1696
        %v1698 = vlaneseq
        %v1699 = vshrl.u32 %v1698, 7
        %v1700 = vsub.s32 3, %v1699
        %v1701 = vrot.slane %v1684, %v1700
        %v1738 = vunpack.c.l.b16 %v1652
        %v1739 = vunpack.c.h.b16 %v1652
        %v1740 = vunpack.c.l.b16 %v1653
        %v1741 = vunpack.c.h.b16 %v1653
        %v1742 = vunpack.c.l.b16 %v1654
        %v1743 = vunpack.c.h.b16 %v1654
        %v1744 = vunpack.c.l.b16 %v1655
        %v1745 = vunpack.c.h.b16 %v1655
        %v1746 = vunpack.c.l.b16 %v1656
        %v1747 = vunpack.c.h.b16 %v1656
        %v1748 = vunpack.c.l.b16 %v1657
        %v1749 = vunpack.c.h.b16 %v1657
        %v1750 = vunpack.c.l.b16 %v1658
        %v1751 = vunpack.c.h.b16 %v1658
        %v1752 = vunpack.c.l.b16 %v1659
        %v1753 = vunpack.c.h.b16 %v1659
        %v1754 = vunpack.c.l.b16 %v1660
        %v1755 = vunpack.c.h.b16 %v1660
        %v1756 = vunpack.c.l.b16 %v1661
        %v1757 = vunpack.c.h.b16 %v1661
        %v1758 = vunpack.c.l.b16 %v1662
        %v1759 = vunpack.c.h.b16 %v1662
        %v1760 = vunpack.c.l.b16 %v1663
        %v1761 = vunpack.c.h.b16 %v1663
        %v1762 = vunpack.c.l.b16 %v1664
        %v1763 = vunpack.c.h.b16 %v1664
        %v1764 = vunpack.c.l.b16 %v1665
        %v1765 = vunpack.c.h.b16 %v1665
        %v1766 = vunpack.c.l.b16 %v1666
        %v1767 = vunpack.c.h.b16 %v1666
        %v1768 = vunpack.c.l.b16 %v1667
        %v1769 = vunpack.c.h.b16 %v1667
        %v1770 = vunpack.c.l.b16 %v1668
        %v1771 = vunpack.c.h.b16 %v1668
        %v1772 = vunpack.c.l.b16 %v1669
        %v1773 = vunpack.c.h.b16 %v1669
        %v1774 = vunpack.c.l.b16 %v1670
        %v1775 = vunpack.c.h.b16 %v1670
        %v1776 = vunpack.c.l.b16 %v1671
        %v1777 = vunpack.c.h.b16 %v1671
        %v1778 = vunpack.c.l.b16 %v1672
        %v1779 = vunpack.c.h.b16 %v1672
        %v1780 = vunpack.c.l.b16 %v1673
        %v1781 = vunpack.c.h.b16 %v1673
        %v1782 = vunpack.c.l.b16 %v1674
        %v1783 = vunpack.c.h.b16 %v1674
        %v1784 = vunpack.c.l.b16 %v1675
        %v1785 = vunpack.c.h.b16 %v1675
        %v1786 = vunpack.c.l.b16 %v1676
        %v1787 = vunpack.c.h.b16 %v1676
        %v1788 = vunpack.c.l.b16 %v1677
        %v1789 = vunpack.c.h.b16 %v1677
        %v1790 = vunpack.c.l.b16 %v1678
        %v1791 = vunpack.c.h.b16 %v1678
        %v1792 = vunpack.c.l.b16 %v1679
        %v1793 = vunpack.c.h.b16 %v1679
        %v1794 = vunpack.c.l.b16 %v1680
        %v1795 = vunpack.c.h.b16 %v1680
        %v1796 = vunpack.c.l.b16 %v1681
        %v1797 = vunpack.c.h.b16 %v1681
        %v1798 = vunpack.c.l.b16 %v1682
        %v1799 = vunpack.c.h.b16 %v1682
        %v1800 = vunpack.c.l.b16 %v1683
        %v1801 = vunpack.c.h.b16 %v1683
        %v1802 = vpack.c.b16 %v1742, %v1738
        %v1803 = vpack.c.b16 %v1743, %v1739
        %v1804 = vpack.c.b16 %v1744, %v1740
        %v1805 = vpack.c.b16 %v1745, %v1741
        %v1806 = vpack.c.b16 %v1750, %v1746
        %v1807 = vpack.c.b16 %v1751, %v1747
        %v1808 = vpack.c.b16 %v1752, %v1748
        %v1809 = vpack.c.b16 %v1753, %v1749
        %v1810 = vpack.c.b16 %v1758, %v1754
        %v1811 = vpack.c.b16 %v1759, %v1755
        %v1812 = vpack.c.b16 %v1760, %v1756
        %v1813 = vpack.c.b16 %v1761, %v1757
        %v1814 = vpack.c.b16 %v1766, %v1762
        %v1815 = vpack.c.b16 %v1767, %v1763
        %v1816 = vpack.c.b16 %v1768, %v1764
        %v1817 = vpack.c.b16 %v1769, %v1765
        %v1818 = vpack.c.b16 %v1774, %v1770
        %v1819 = vpack.c.b16 %v1775, %v1771
        %v1820 = vpack.c.b16 %v1776, %v1772
        %v1821 = vpack.c.b16 %v1777, %v1773
        %v1822 = vpack.c.b16 %v1782, %v1778
        %v1823 = vpack.c.b16 %v1783, %v1779
        %v1824 = vpack.c.b16 %v1784, %v1780
        %v1825 = vpack.c.b16 %v1785, %v1781
        %v1826 = vpack.c.b16 %v1790, %v1786
        %v1827 = vpack.c.b16 %v1791, %v1787
        %v1828 = vpack.c.b16 %v1792, %v1788
        %v1829 = vpack.c.b16 %v1793, %v1789
        %v1830 = vpack.c.b16 %v1798, %v1794
        %v1831 = vpack.c.b16 %v1799, %v1795
        %v1832 = vpack.c.b16 %v1800, %v1796
        %v1833 = vpack.c.b16 %v1801, %v1797
        %1866 = vmatprep.subr.bf16.mxu0 %v1803
        %1867 = vmatpush1.bf16.msra.mxu0 %v1802
        %1868 = vmatprep.subr.bf16.mxu0 %v1807
        %1869 = vmatpush1.bf16.msra.mxu0 %v1806
        %1870 = vmatprep.subr.bf16.mxu0 %v1811
        %1871 = vmatpush1.bf16.msra.mxu0 %v1810
        %1872 = vmatprep.subr.bf16.mxu0 %v1815
        %1873 = vmatpush1.bf16.msra.mxu0 %v1814
        %1874 = vmatprep.subr.bf16.mxu0 %v1819
        %1875 = vmatpush1.bf16.msra.mxu0 %v1818
        %1876 = vmatprep.subr.bf16.mxu0 %v1823
        %1877 = vmatpush1.bf16.msra.mxu0 %v1822
        %1878 = vmatprep.subr.bf16.mxu0 %v1827
        %1879 = vmatpush1.bf16.msra.mxu0 %v1826
        %1880 = vmatprep.subr.bf16.mxu0 %v1831
        %1881 = vmatpush1.bf16.msra.mxu0 %v1830
        %1882 = vmatprep.subr.bf16.mxu0 0
        %1883 = vmatpush1.bf16.msra.mxu0 0
        %1884 = vmatprep.subr.bf16.mxu0 0
        %1885 = vmatpush1.bf16.msra.mxu0 0
        %1886 = vmatprep.subr.bf16.mxu0 0
        %1887 = vmatpush1.bf16.msra.mxu0 0
        %1888 = vmatprep.subr.bf16.mxu0 0
        %1889 = vmatpush1.bf16.msra.mxu0 0
        %1890 = vmatprep.subr.bf16.mxu0 0
        %1891 = vmatpush1.bf16.msra.mxu0 0
        %1892 = vmatprep.subr.bf16.mxu0 0
        %1893 = vmatpush1.bf16.msra.mxu0 0
        %1894 = vmatprep.subr.bf16.mxu0 0
        %1895 = vmatpush1.bf16.msra.mxu0 0
        %1896 = vmatprep.subr.bf16.mxu0 0
        %1897 = vmatpush1.bf16.msra.mxu0 0
        %1898 = vmatprep.mubr.bf16.mxu0 0
        %1899 = vmatmul.mubr.bf16.gmra.mrb[0].mxu0 %v1651
        %v1900 = vpop.f32.mrb[0].mxu0
        %v1901 = vadd.f32 %v1689, %v1900
        %v1902 = vpop.f32.mrb[0].mxu0
        %v1903 = vadd.f32 %v1693, %v1902
        %v1904 = vpop.f32.mrb[0].mxu0
        %v1905 = vadd.f32 %v1689, %v1904
        %v1906 = vpop.f32.mrb[0].mxu0
        %v1907 = vadd.f32 %v1693, %v1906
        %1908 = vdwg.mxu0
        %1909 = vmatprep.subr.bf16.mxu0 %v1805
        %1910 = vmatpush1.bf16.msra.mxu0 %v1804
        %1911 = vmatprep.subr.bf16.mxu0 %v1809
        %1912 = vmatpush1.bf16.msra.mxu0 %v1808
        %1913 = vmatprep.subr.bf16.mxu0 %v1813
        %1914 = vmatpush1.bf16.msra.mxu0 %v1812
        %1915 = vmatprep.subr.bf16.mxu0 %v1817
        %1916 = vmatpush1.bf16.msra.mxu0 %v1816
        %1917 = vmatprep.subr.bf16.mxu0 %v1821
        %1918 = vmatpush1.bf16.msra.mxu0 %v1820
        %1919 = vmatprep.subr.bf16.mxu0 %v1825
        %1920 = vmatpush1.bf16.msra.mxu0 %v1824
        %1921 = vmatprep.subr.bf16.mxu0 %v1829
        %1922 = vmatpush1.bf16.msra.mxu0 %v1828
        %1923 = vmatprep.subr.bf16.mxu0 %v1833
        %1924 = vmatpush1.bf16.msra.mxu0 %v1832
        %1925 = vmatprep.subr.bf16.mxu0 0
        %1926 = vmatpush1.bf16.msra.mxu0 0
        %1927 = vmatprep.subr.bf16.mxu0 0
        %1928 = vmatpush1.bf16.msra.mxu0 0
        %1929 = vmatprep.subr.bf16.mxu0 0
        %1930 = vmatpush1.bf16.msra.mxu0 0
        %1931 = vmatprep.subr.bf16.mxu0 0
        %1932 = vmatpush1.bf16.msra.mxu0 0
        %1933 = vmatprep.subr.bf16.mxu0 0
        %1934 = vmatpush1.bf16.msra.mxu0 0
        %1935 = vmatprep.subr.bf16.mxu0 0
        %1936 = vmatpush1.bf16.msra.mxu0 0
        %1937 = vmatprep.subr.bf16.mxu0 0
        %1938 = vmatpush1.bf16.msra.mxu0 0
        %1939 = vmatprep.subr.bf16.mxu0 0
        %1940 = vmatpush1.bf16.msra.mxu0 0
        %1941 = vmatprep.mubr.bf16.mxu0 0
        %1942 = vmatmul.mubr.bf16.gmra.mrb[0].mxu0 %v1651
        %v1943 = vpop.f32.mrb[0].mxu0
        %v1944 = vadd.f32 %v1697, %v1943
        %v1945 = vpop.f32.mrb[0].mxu0
        %v1946 = vadd.f32 %v1701, %v1945
        %v1947 = vpop.f32.mrb[0].mxu0
        %v1948 = vadd.f32 %v1697, %v1947
        %v1949 = vpop.f32.mrb[0].mxu0
        %v1950 = vadd.f32 %v1701, %v1949
        %1951 = vdwg.mxu0
        %v1952 = vxor.u32 %v1944, 2147483648
        %v1953 = vxor.u32 %v1946, 2147483648
        %v1954 = vxor.u32 %v1948, 2147483648
        %v1955 = vxor.u32 %v1950, 2147483648
        %v1956 = vmul.f32 %v1952, 1.442695
        %v1957 = vpow.pop %v1956
        %v1958 = vmul.f32 %v1953, 1.442695
        %v1959 = vpow.pop %v1958
        %v1960 = vmul.f32 %v1954, 1.442695
        %v1961 = vpow.pop %v1960
        %v1962 = vmul.f32 %v1955, 1.442695
        %v1963 = vpow.pop %v1962
        %v1964 = vadd.f32 %v1957, 1.0
        %v1965 = vadd.f32 %v1959, 1.0
        %v1966 = vadd.f32 %v1961, 1.0
        %v1967 = vadd.f32 %v1963, 1.0
        %v1968 = vrcp.pop %v1964
        %v1969 = vmul.f32 1.0, %v1968
        %v1970 = vrcp.pop %v1965
        %v1971 = vmul.f32 1.0, %v1970
        %v1972 = vrcp.pop %v1966
        %v1973 = vmul.f32 1.0, %v1972
        %v1974 = vrcp.pop %v1967
        %v1975 = vmul.f32 1.0, %v1974
        %v1976 = vmul.f32 %v1944, %v1969
        %v1977 = vmul.f32 %v1946, %v1971
        %v1978 = vmul.f32 %v1948, %v1973
        %v1979 = vmul.f32 %v1950, %v1975
        %v1980 = vmul.f32 %v1901, %v1976
        %v1981 = vmul.f32 %v1903, %v1977
        %v1982 = vmul.f32 %v1905, %v1978
        %v1983 = vmul.f32 %v1907, %v1979
        %v1984 = vpack.c.bf16 %v1982, %v1980
        %v1985 = vpack.c.bf16 %v1983, %v1981
        %v1986 = vld [vmem:[#allocation9] sm:$0xf]
        %v1987 = vld [vmem:[#allocation9 + $0x4] sm:$0xf]
        %v1988 = vld [vmem:[#allocation9 + $0x8] sm:$0xf]
        %v1989 = vld [vmem:[#allocation9 + $0xc] sm:$0xf]
        %v1990 = vld [vmem:[#allocation9 + $0x10] sm:$0xf]
        %v1991 = vld [vmem:[#allocation9 + $0x14] sm:$0xf]
        %v1992 = vld [vmem:[#allocation9 + $0x18] sm:$0xf]
        %v1993 = vld [vmem:[#allocation9 + $0x1c] sm:$0xf]
        %v1994 = vld [vmem:[#allocation9 + $0x20] sm:$0xf]
        %v1995 = vld [vmem:[#allocation9 + $0x24] sm:$0xf]
        %v1996 = vld [vmem:[#allocation9 + $0x28] sm:$0xf]
        %v1997 = vld [vmem:[#allocation9 + $0x2c] sm:$0xf]
        %v1998 = vld [vmem:[#allocation9 + $0x30] sm:$0xf]
        %v1999 = vld [vmem:[#allocation9 + $0x34] sm:$0xf]
        %v2000 = vld [vmem:[#allocation9 + $0x38] sm:$0xf]
        %v2001 = vld [vmem:[#allocation9 + $0x3c] sm:$0xf]
        %v2002 = vld [vmem:[#allocation9 + $0x40] sm:$0xf]
        %v2003 = vld [vmem:[#allocation9 + $0x44] sm:$0xf]
        %v2004 = vld [vmem:[#allocation9 + $0x48] sm:$0xf]
        %v2005 = vld [vmem:[#allocation9 + $0x4c] sm:$0xf]
        %v2006 = vld [vmem:[#allocation9 + $0x50] sm:$0xf]
        %v2007 = vld [vmem:[#allocation9 + $0x54] sm:$0xf]
        %v2008 = vld [vmem:[#allocation9 + $0x58] sm:$0xf]
        %v2009 = vld [vmem:[#allocation9 + $0x5c] sm:$0xf]
        %v2010 = vld [vmem:[#allocation9 + $0x60] sm:$0xf]
        %v2011 = vld [vmem:[#allocation9 + $0x64] sm:$0xf]
        %v2012 = vld [vmem:[#allocation9 + $0x68] sm:$0xf]
        %v2013 = vld [vmem:[#allocation9 + $0x6c] sm:$0xf]
        %v2014 = vld [vmem:[#allocation9 + $0x70] sm:$0xf]
        %v2015 = vld [vmem:[#allocation9 + $0x74] sm:$0xf]
        %v2016 = vld [vmem:[#allocation9 + $0x78] sm:$0xf]
        %v2017 = vld [vmem:[#allocation9 + $0x7c] sm:$0xf]
        %v2018 = vld [vmem:[%s10] sm:$0x1]
        %v2020 = vlaneseq
        %v2021 = vshrl.u32 %v2020, 7
        %v2022 = vsub.s32 0, %v2021
        %v2023 = vrot.slane %v2018, %v2022
        %v2057 = vunpack.c.l.b16 %v1986
        %v2058 = vunpack.c.l.b16 %v1987
        %v2059 = vunpack.c.l.b16 %v1988
        %v2060 = vunpack.c.l.b16 %v1989
        %v2061 = vunpack.c.l.b16 %v1990
        %v2062 = vunpack.c.l.b16 %v1991
        %v2063 = vunpack.c.l.b16 %v1992
        %v2064 = vunpack.c.l.b16 %v1993
        %v2065 = vunpack.c.l.b16 %v1994
        %v2066 = vunpack.c.l.b16 %v1995
        %v2067 = vunpack.c.l.b16 %v1996
        %v2068 = vunpack.c.l.b16 %v1997
        %v2069 = vunpack.c.l.b16 %v1998
        %v2070 = vunpack.c.l.b16 %v1999
        %v2071 = vunpack.c.l.b16 %v2000
        %v2072 = vunpack.c.l.b16 %v2001
        %v2073 = vunpack.c.l.b16 %v2002
        %v2074 = vunpack.c.l.b16 %v2003
        %v2075 = vunpack.c.l.b16 %v2004
        %v2076 = vunpack.c.l.b16 %v2005
        %v2077 = vunpack.c.l.b16 %v2006
        %v2078 = vunpack.c.l.b16 %v2007
        %v2079 = vunpack.c.l.b16 %v2008
        %v2080 = vunpack.c.l.b16 %v2009
        %v2081 = vunpack.c.l.b16 %v2010
        %v2082 = vunpack.c.l.b16 %v2011
        %v2083 = vunpack.c.l.b16 %v2012
        %v2084 = vunpack.c.l.b16 %v2013
        %v2085 = vunpack.c.l.b16 %v2014
        %v2086 = vunpack.c.l.b16 %v2015
        %v2087 = vunpack.c.l.b16 %v2016
        %v2088 = vunpack.c.l.b16 %v2017
        %v2089 = vpack.c.b16 %v2058, %v2057
        %v2090 = vpack.c.b16 %v2060, %v2059
        %v2091 = vpack.c.b16 %v2062, %v2061
        %v2092 = vpack.c.b16 %v2064, %v2063
        %v2093 = vpack.c.b16 %v2066, %v2065
        %v2094 = vpack.c.b16 %v2068, %v2067
        %v2095 = vpack.c.b16 %v2070, %v2069
        %v2096 = vpack.c.b16 %v2072, %v2071
        %v2097 = vpack.c.b16 %v2074, %v2073
        %v2098 = vpack.c.b16 %v2076, %v2075
        %v2099 = vpack.c.b16 %v2078, %v2077
        %v2100 = vpack.c.b16 %v2080, %v2079
        %v2101 = vpack.c.b16 %v2082, %v2081
        %v2102 = vpack.c.b16 %v2084, %v2083
        %v2103 = vpack.c.b16 %v2086, %v2085
        %v2104 = vpack.c.b16 %v2088, %v2087
        %2121 = vmatprep.subr.bf16.mxu0 0
        %2122 = vmatpush1.bf16.msra.mxu0 %v2089
        %2123 = vmatprep.subr.bf16.mxu0 0
        %2124 = vmatpush1.bf16.msra.mxu0 %v2090
        %2125 = vmatprep.subr.bf16.mxu0 0
        %2126 = vmatpush1.bf16.msra.mxu0 %v2091
        %2127 = vmatprep.subr.bf16.mxu0 0
        %2128 = vmatpush1.bf16.msra.mxu0 %v2092
        %2129 = vmatprep.subr.bf16.mxu0 0
        %2130 = vmatpush1.bf16.msra.mxu0 %v2093
        %2131 = vmatprep.subr.bf16.mxu0 0
        %2132 = vmatpush1.bf16.msra.mxu0 %v2094
        %2133 = vmatprep.subr.bf16.mxu0 0
        %2134 = vmatpush1.bf16.msra.mxu0 %v2095
        %2135 = vmatprep.subr.bf16.mxu0 0
        %2136 = vmatpush1.bf16.msra.mxu0 %v2096
        %2137 = vmatprep.subr.bf16.mxu0 0
        %2138 = vmatpush1.bf16.msra.mxu0 %v2097
        %2139 = vmatprep.subr.bf16.mxu0 0
        %2140 = vmatpush1.bf16.msra.mxu0 %v2098
        %2141 = vmatprep.subr.bf16.mxu0 0
        %2142 = vmatpush1.bf16.msra.mxu0 %v2099
        %2143 = vmatprep.subr.bf16.mxu0 0
        %2144 = vmatpush1.bf16.msra.mxu0 %v2100
        %2145 = vmatprep.subr.bf16.mxu0 0
        %2146 = vmatpush1.bf16.msra.mxu0 %v2101
        %2147 = vmatprep.subr.bf16.mxu0 0
        %2148 = vmatpush1.bf16.msra.mxu0 %v2102
        %2149 = vmatprep.subr.bf16.mxu0 0
        %2150 = vmatpush1.bf16.msra.mxu0 %v2103
        %2151 = vmatprep.subr.bf16.mxu0 0
        %2152 = vmatpush1.bf16.msra.mxu0 %v2104
        %2153 = vmatprep.mubr.bf16.mxu0 %v1985
        %2154 = vmatmul.mubr.bf16.gmra.mrb[0].mxu0 %v1984
        %v2155 = vpop.f32.mrb[0].mxu0
        %v2156 = vadd.f32 %v2023, %v2155
        %v2157 = vpop.f32.mrb[0].mxu0
        %v2158 = vpop.f32.mrb[0].mxu0
        %v2159 = vadd.f32 %v2023, %v2158
        %v2160 = vpop.f32.mrb[0].mxu0
        %2161 = vdwg.mxu0
        %v2162 = vadd.f32 %v1626, %v2156
        %v2163 = vadd.f32 %v1627, %v2159
        %v2164 = vpack.c.bf16 %v2163, %v2162
        %v2166 = vunpack.c.l.b16 %v2164
        %v2167 = vunpack.c.h.b16 %v2164
        %v2168 = vpack.c.b16 %v2166, %v2166
        %v2169 = vpack.c.b16 %v2167, %v2167
        %2172 = vst [vmem:[%s547] sm:$0xf] %v2168
        %2173 = vst [vmem:[%s547 + $0x4] sm:$0xf] %v2169
        %s2174 = sand.u32 %s356, 1
        %s2175 = scalar_lea.sflag [#allocation6], %s2174
        %s2176 = sand.u32 %s356, 1
        %s2177 = smul.addr %s2176, 8
        %s2178 = scalar_lea.vmem [#allocation12], %s2177
        // Predicated region
        $region97: #{tpu_custom_call.1} parent=75 // pred_check
          %p2179 = pneg %p366
        $region98: #{tpu_custom_call.1} parent=75 // pred_check_branch
          %2181 = sbr.rel (%p2179) target = $region100
        $region99: #{tpu_custom_call.1} parent=75 // pred_region
          %s2182 = smul.u32 2, %s38
          %s2184 = ssub.s32 128, 128
          %2185 = vsyncadd %s2175, %s2184
          %s2186 = smul.addr %s37, 4
          %s2187 = sadd.s32 %s2182, %s2186
          %s2188 = smul.addr %s2187, 64
          %s2189 = scalar_lea.hbm %s14, %s2188
          %s2190 = sshll.u32 %s2178, 4
          %s2191 = int_to_ptr.vmem [resolvable:$true] %s2190
          %2196 = dma.vmem_to_hbm [thread:$0]  %s2191, 128, %s2189, %s2175, 64, 64, 4
        $region100: #{tpu_custom_call.1} parent=75 // pred_fallthru
          _
      $region76: #{tpu_custom_call.1} parent=5 // pred_fallthru
        _
      %p2197 = scmp.le.s32.totalorder 2, %s28
      // Predicated region
      $region101: #{tpu_custom_call.1} parent=5 // pred_check
        %p2198 = pneg %p2197
      $region102: #{tpu_custom_call.1} parent=5 // pred_check_branch
        %2200 = sbr.rel (%p2198) target = $region104
      $region103: #{tpu_custom_call.1} parent=5 // pred_region
        %s2201 = ssub.s32 %s28, 2
        // Predicated region
        $region105: #{tpu_custom_call.1} parent=103 // pred_check
          %p2202 = pneg %p372
        $region106: #{tpu_custom_call.1} parent=103 // pred_check_branch
          %2204 = sbr.rel (%p2202) target = $region108
        $region107: #{tpu_custom_call.1} parent=103 // pred_region
          %s2205 = sand.u32 %s357, 1
          %s2206 = scalar_lea.sflag [#allocation6], %s2205
          %s2207 = sand.u32 %s357, 1
          %s2208 = smul.addr %s2207, 8
          %s2209 = scalar_lea.vmem [#allocation12], %s2208
          %2210 = dma.done %s2206, 128
        $region108: #{tpu_custom_call.1} parent=103 // pred_fallthru
          _
      $region104: #{tpu_custom_call.1} parent=5 // pred_fallthru
        _
    $region6: #{tpu_custom_call.1} parent=1 // loop_footer
      %s32 = sadd.s32 1, %s28
    $region7: #{tpu_custom_call.1} parent=1 // loop_footer_branch
      %27 = sbr.rel target = $region3
    $region8: #{tpu_custom_call.1} parent=1 // loop_exit
      _
    %2211 = vsyncpa [#allocation5], 1
    %s2212 = scalar_lea.sflag [#allocation5], 1
    %2213 = vsyncpa %s2212, 1
    %2214 = vsyncpa [#allocation8], 1
    %2215 = vsyncpa [#allocation11], 1
    %2216 = vsyncpa [#allocation6], 1
    %s2217 = scalar_lea.sflag [#allocation6], 1
    %2218 = vsyncpa %s2217, 1

</llo_original>
